<compile_context>
chip_gen: v7x
topology: tpu7x:2x2x1
jax: 0.10.0
libtpu: 0.0.40
codegen_flags: <defaults>
</compile_context>

<pallas_src>
import functools

import jax
import jax.numpy as jnp
from jax.experimental import pallas as pl
from jax.experimental.pallas import tpu as pltpu


def _middle_flow_kernel(x_ref, dww_ref, pww_ref, pwb_ref, o_ref, *, W, C):
    """One batch item per grid step.  x_ref/o_ref: (1, D, H*W*C)."""
    _, D, HWC = x_ref.shape
    x = x_ref[0]                                               # (D, HWC) residual input

    # Depth-border masks (shared by all 3 blocks): valid iff the source depth d+oz is in range.
    d_idx = jax.lax.broadcasted_iota(jnp.int32, (D, HWC), 0)
    zmask = {-1: d_idx >= 1, 1: d_idx <= D - 2}

    cur = x
    for blk in range(3):
        # ---- depthwise 3x3x3 conv (stride 1, pad 1, groups=C); bias/BN folded into the matmul ----
        # Three depth-shifted copies (XLU sublane rotate + depth mask), each shared by 9 lane taps.
        shifted_z = []
        for oz in (-1, 0, 1):
            if oz == 0:
                shifted_z.append(cur)
            else:
                r = pltpu.roll(cur, (-oz) % D, axis=0)
                shifted_z.append(jnp.where(zmask[oz], r, 0.0))

        acc = None
        tap = 0
        for zi in range(3):                                    # oz = -1, 0, 1
            xz = shifted_z[zi]
            for oy in (-1, 0, 1):
                for ox in (-1, 0, 1):
                    dl = (oy * W + ox) * C                     # lane offset of the source voxel
                    r = xz if dl == 0 else pltpu.roll(xz, (-dl) % HWC, axis=1)
                    contrib = r * dww_ref[blk, tap, :]         # h/w border masks pre-folded (zeros)
                    acc = contrib if acc is None else acc + contrib
                    tap += 1

        # ---- pointwise 1x1x1 conv (block-diag MXU matmul) + folded dw-bias/BN1/BN2 + ReLU ----
        pw = jnp.dot(acc, pww_ref[blk], preferred_element_type=jnp.float32) + pwb_ref[blk, :]
        cur = jnp.maximum(pw, 0.0)

    # ---- residual add + final ReLU ----
    o_ref[0] = jnp.maximum(cur + x, 0.0)


def middle_flow_block(x_ncdhw, params):
    """x_ncdhw: (N, C, D, H, W) float32 (PyTorch convention). Returns the same shape."""
    dww, pww, pwb = params                                     # pre-folded kernel-layout weights
    N, C, D, H, W = x_ncdhw.shape
    HWC = H * W * C
    # NCDHW -> lane-dense (N, D, H*W*C): lane index = (h*W + w)*C + c.
    x = jnp.transpose(x_ncdhw, (0, 2, 3, 4, 1)).reshape(N, D, HWC).astype(jnp.float32)

    kernel = functools.partial(_middle_flow_kernel, W=W, C=C)
    out = pl.pallas_call(
        kernel,
        out_shape=jax.ShapeDtypeStruct((N, D, HWC), jnp.float32),
        grid=(N,),
        in_specs=[
            pl.BlockSpec((1, D, HWC), lambda n: (n, 0, 0)),    # one batch item per grid step
            pl.BlockSpec(dww.shape, lambda n: (0, 0, 0)),      # (3, 27, HWC) depthwise tap weights
            pl.BlockSpec(pww.shape, lambda n: (0, 0, 0)),      # (3, HWC, HWC) folded pointwise weights
            pl.BlockSpec(pwb.shape, lambda n: (0, 0)),         # (3, HWC) folded bias
        ],
        out_specs=pl.BlockSpec((1, D, HWC), lambda n: (n, 0, 0)),
        compiler_params=pltpu.CompilerParams(dimension_semantics=("parallel",)),
    )(x, dww, pww, pwb)
    return jnp.transpose(out.reshape(N, D, H, W, C), (0, 4, 1, 2, 3))   # -> NCDHW


def _fold_bn(gamma, beta, mean, var, eps=1e-5):
    scale = gamma / jnp.sqrt(var + eps)
    return scale, beta - mean * scale


def fold_params(dw_w_t, dw_b, bn1, pw_w_t, pw_b, bn2, H, W):
    """Fold depthwise bias + both BatchNorms into the pointwise conv and lay out weights for the
    lane-dense (D, H*W*C) kernel layout.

    PyTorch-layout inputs: dw_w_t (3, C, 1, 3, 3, 3), dw_b (3, C), pw_w_t (3, C, C, 1, 1, 1),
    pw_b (3, C), bn1/bn2 = (gamma, beta, mean, var) each (3, C)."""
    n_blk, C = dw_b.shape
    HW = H * W

    s1, t1 = _fold_bn(*bn1)                                    # BN inside the separable conv
    s2, t2 = _fold_bn(*bn2)                                    # BN after the separable conv
    w_mat = jnp.transpose(pw_w_t.reshape(n_blk, C, C), (0, 2, 1))          # (3, Cin, Cout)

    # q = dwconv_nobias(x) @ Wf + bf  ==  BN2(pointwise(BN1(dwconv(x) + dw_b)))
    w_f = s1[:, :, None] * w_mat * s2[:, None, :]                          # (3, Cin, Cout)
    b_f = (jnp.einsum("bi,bio->bo", dw_b * s1 + t1, w_mat) + pw_b) * s2 + t2   # (3, Cout)

    # Block-diagonal expansion over the H*W positions held in the lane dimension.
    eye_hw = jnp.eye(HW, dtype=jnp.float32)
    pww = jnp.stack([jnp.kron(eye_hw, w_f[b]) for b in range(n_blk)])      # (3, HWC, HWC)
    pwb = jnp.tile(b_f, (1, HW))                                           # (3, HWC)

    # Depthwise tap weights tiled to lanes, with H/W border masks folded in as zeros.
    dwk = dw_w_t.reshape(n_blk, C, 27)                                     # tap = kd*9 + kh*3 + kw
    lane = jnp.arange(HW * C)
    h_l = lane // (W * C)
    w_l = (lane // C) % W
    taps = []
    for kd in range(3):
        for kh in range(3):
            for kw in range(3):
                oy, ox = kh - 1, kw - 1
                valid = ((h_l + oy >= 0) & (h_l + oy < H) &
                         (w_l + ox >= 0) & (w_l + ox < W)).astype(jnp.float32)   # (HWC,)
                w_tap = jnp.tile(dwk[:, :, kd * 9 + kh * 3 + kw], (1, HW))       # (3, HWC)
                taps.append(w_tap * valid[None, :])
    dww = jnp.stack(taps, axis=1)                                          # (3, 27, HWC)
    return dww, pww, pwb


def _reference(x_ncdhw, torch_params):
    """Pure-JAX reference using lax convs (PyTorch semantics, inference-mode BN)."""
    dw_w_t, dw_b, bn1, pw_w_t, pw_b, bn2 = torch_params
    x = jnp.transpose(x_ncdhw, (0, 2, 3, 4, 1)).astype(jnp.float32)
    C = x.shape[-1]
    cur = x
    for blk in range(3):
        k = jnp.transpose(dw_w_t[blk], (2, 3, 4, 1, 0))                    # (3,3,3,1,C)
        cur = jax.lax.conv_general_dilated(
            cur, k, (1, 1, 1), ((1, 1), (1, 1), (1, 1)),
            dimension_numbers=("NDHWC", "DHWIO", "NDHWC"),
            feature_group_count=C) + dw_b[blk]
        sc, bi = _fold_bn(*[p[blk] for p in bn1])
        cur = cur * sc + bi
        k = jnp.transpose(pw_w_t[blk], (2, 3, 4, 1, 0))                    # (1,1,1,Cin,Cout)
        cur = jax.lax.conv_general_dilated(
            cur, k, (1, 1, 1), "VALID",
            dimension_numbers=("NDHWC", "DHWIO", "NDHWC")) + pw_b[blk]
        sc, bi = _fold_bn(*[p[blk] for p in bn2])
        cur = jnp.maximum(cur * sc + bi, 0.0)
    out = jnp.maximum(cur + x, 0.0)
    return jnp.transpose(out, (0, 4, 1, 2, 3))


if __name__ == "__main__":
    key = jax.random.PRNGKey(0)
    ks = jax.random.split(key, 8)
    # Residual add requires in_channels == out_channels.  H*W*C = 128 -> one full lane group.
    N, C, D, H, W = 2, 8, 8, 4, 4                                          # NCDHW (PyTorch)

    x = jax.random.normal(ks[0], (N, C, D, H, W), jnp.float32)

    # Parameters for the 3 DepthwiseSeparableConv3D blocks (PyTorch weight layouts).
    # nn.Conv3d default bias=True in both the depthwise and pointwise convs.
    dw_w_t = 0.2 * jax.random.normal(ks[1], (3, C, 1, 3, 3, 3), jnp.float32)
    dw_b = 0.1 * jax.random.normal(ks[2], (3, C), jnp.float32)
    pw_w_t = 0.2 * jax.random.normal(ks[3], (3, C, C, 1, 1, 1), jnp.float32)
    pw_b = 0.1 * jax.random.normal(ks[4], (3, C), jnp.float32)

    def bn_params(k):
        k1, k2, k3, k4 = jax.random.split(k, 4)
        gamma = 1.0 + 0.1 * jax.random.normal(k1, (3, C), jnp.float32)
        beta = 0.1 * jax.random.normal(k2, (3, C), jnp.float32)
        mean = 0.1 * jax.random.normal(k3, (3, C), jnp.float32)
        var = 0.5 + jax.random.uniform(k4, (3, C), jnp.float32)
        return gamma, beta, mean, var

    bn1 = bn_params(ks[5])    # BatchNorm3d inside DepthwiseSeparableConv3D
    bn2 = bn_params(ks[6])    # BatchNorm3d after each separable conv in the Sequential

    params = fold_params(dw_w_t, dw_b, bn1, pw_w_t, pw_b, bn2, H, W)

    out = jax.block_until_ready(middle_flow_block(x, params))
    ref = jax.block_until_ready(_reference(x, (dw_w_t, dw_b, bn1, pw_w_t, pw_b, bn2)))

    assert out.shape == x.shape and out.dtype == jnp.float32
    if not jnp.allclose(out, ref, rtol=1e-4, atol=1e-4):
        raise AssertionError("Pallas kernel does not match JAX reference")
    print("KERNEL_OK")
</pallas_src>

<mosaic_0001>
module attributes {stable_mosaic.version = 11 : i64} {
  func.func @_middle_flow_kernel(%arg0: i32, %arg1: memref<1x8x128xf32, #tpu.memory_space<vmem>>, %arg2: memref<3x27x128xf32, #tpu.memory_space<vmem>>, %arg3: memref<3x128x128xf32, #tpu.memory_space<vmem>>, %arg4: memref<3x128xf32, #tpu.memory_space<vmem>>, %arg5: memref<1x8x128xf32, #tpu.memory_space<vmem>>) attributes {dimension_semantics = [#tpu.dimension_semantics<parallel>], iteration_bounds = array<i64: 2>, scalar_prefetch = 0 : i64, scratch_operands = 0 : i64, tpu.core_type = #tpu.core_type<tc>, window_params = [{transform_indices = @transform_0, window_bounds = array<i64: 1, 8, 128>}, {pipeline_mode = #tpu.pipeline_mode<synchronous>, transform_indices = @transform_1, window_bounds = array<i64: 3, 27, 128>}, {pipeline_mode = #tpu.pipeline_mode<synchronous>, transform_indices = @transform_2, window_bounds = array<i64: 3, 128, 128>}, {pipeline_mode = #tpu.pipeline_mode<synchronous>, transform_indices = @transform_3, window_bounds = array<i64: 3, 128>}, {transform_indices = @transform_4, window_bounds = array<i64: 1, 8, 128>}]} {
    %c0 = arith.constant 0 : index
    %c0_0 = arith.constant 0 : index
    %c0_1 = arith.constant 0 : index
    %0 = vector.load %arg1[%c0, %c0_0, %c0_1] : memref<1x8x128xf32, #tpu.memory_space<vmem>>, vector<1x8x128xf32>
    %1 = vector.shape_cast %0 : vector<1x8x128xf32> to vector<8x128xf32>
    %2 = tpu.iota {dimensions = array<i32: 0>} : vector<8x128xi32>
    %c1_i32 = arith.constant 1 : i32
    %3 = vector.broadcast %c1_i32 : i32 to vector<8x128xi32>
    %4 = arith.cmpi sge, %2, %3 : vector<8x128xi32>
    %c6_i32 = arith.constant 6 : i32
    %5 = vector.broadcast %c6_i32 : i32 to vector<8x128xi32>
    %6 = arith.cmpi sle, %2, %5 : vector<8x128xi32>
    %c1_i32_2 = arith.constant 1 : i32
    %7 = tpu.dynamic_rotate %1 by %c1_i32_2 dim 0 : vector<8x128xf32>, i32 -> vector<8x128xf32>
    %cst = arith.constant 0.000000e+00 : f32
    %8 = vector.broadcast %cst : f32 to vector<8x128xf32>
    %9 = arith.select %4, %7, %8 : vector<8x128xi1>, vector<8x128xf32>
    %c7_i32 = arith.constant 7 : i32
    %10 = tpu.dynamic_rotate %1 by %c7_i32 dim 0 : vector<8x128xf32>, i32 -> vector<8x128xf32>
    %cst_3 = arith.constant 0.000000e+00 : f32
    %11 = vector.broadcast %cst_3 : f32 to vector<8x128xf32>
    %12 = arith.select %6, %10, %11 : vector<8x128xi1>, vector<8x128xf32>
    %c40_i32 = arith.constant 40 : i32
    %13 = tpu.dynamic_rotate %9 by %c40_i32 dim 1 : vector<8x128xf32>, i32 -> vector<8x128xf32>
    %c0_4 = arith.constant 0 : index
    %c0_5 = arith.constant 0 : index
    %c0_6 = arith.constant 0 : index
    %14 = vector.load %arg2[%c0_4, %c0_5, %c0_6] : memref<3x27x128xf32, #tpu.memory_space<vmem>>, vector<1x1x128xf32>
    %15 = vector.shape_cast %14 : vector<1x1x128xf32> to vector<128xf32>
    %16 = vector.shape_cast %15 : vector<128xf32> to vector<1x128xf32>
    %17 = vector.broadcast %16 : vector<1x128xf32> to vector<8x128xf32>
    %18 = arith.mulf %13, %17 : vector<8x128xf32>
    %c32_i32 = arith.constant 32 : i32
    %19 = tpu.dynamic_rotate %9 by %c32_i32 dim 1 : vector<8x128xf32>, i32 -> vector<8x128xf32>
    %c0_7 = arith.constant 0 : index
    %c1 = arith.constant 1 : index
    %c0_8 = arith.constant 0 : index
    %20 = vector.load %arg2[%c0_7, %c1, %c0_8] : memref<3x27x128xf32, #tpu.memory_space<vmem>>, vector<1x1x128xf32>
    %21 = vector.shape_cast %20 : vector<1x1x128xf32> to vector<128xf32>
    %22 = vector.shape_cast %21 : vector<128xf32> to vector<1x128xf32>
    %23 = vector.broadcast %22 : vector<1x128xf32> to vector<8x128xf32>
    %24 = arith.mulf %19, %23 : vector<8x128xf32>
    %25 = arith.addf %18, %24 : vector<8x128xf32>
    %c24_i32 = arith.constant 24 : i32
    %26 = tpu.dynamic_rotate %9 by %c24_i32 dim 1 : vector<8x128xf32>, i32 -> vector<8x128xf32>
    %c0_9 = arith.constant 0 : index
    %c2 = arith.constant 2 : index
    %c0_10 = arith.constant 0 : index
    %27 = vector.load %arg2[%c0_9, %c2, %c0_10] : memref<3x27x128xf32, #tpu.memory_space<vmem>>, vector<1x1x128xf32>
    %28 = vector.shape_cast %27 : vector<1x1x128xf32> to vector<128xf32>
    %29 = vector.shape_cast %28 : vector<128xf32> to vector<1x128xf32>
    %30 = vector.broadcast %29 : vector<1x128xf32> to vector<8x128xf32>
    %31 = arith.mulf %26, %30 : vector<8x128xf32>
    %32 = arith.addf %25, %31 : vector<8x128xf32>
    %c8_i32 = arith.constant 8 : i32
    %33 = tpu.dynamic_rotate %9 by %c8_i32 dim 1 : vector<8x128xf32>, i32 -> vector<8x128xf32>
    %c0_11 = arith.constant 0 : index
    %c3 = arith.constant 3 : index
    %c0_12 = arith.constant 0 : index
    %34 = vector.load %arg2[%c0_11, %c3, %c0_12] : memref<3x27x128xf32, #tpu.memory_space<vmem>>, vector<1x1x128xf32>
    %35 = vector.shape_cast %34 : vector<1x1x128xf32> to vector<128xf32>
    %36 = vector.shape_cast %35 : vector<128xf32> to vector<1x128xf32>
    %37 = vector.broadcast %36 : vector<1x128xf32> to vector<8x128xf32>
    %38 = arith.mulf %33, %37 : vector<8x128xf32>
    %39 = arith.addf %32, %38 : vector<8x128xf32>
    %c0_13 = arith.constant 0 : index
    %c4 = arith.constant 4 : index
    %c0_14 = arith.constant 0 : index
    %40 = vector.load %arg2[%c0_13, %c4, %c0_14] : memref<3x27x128xf32, #tpu.memory_space<vmem>>, vector<1x1x128xf32>
    %41 = vector.shape_cast %40 : vector<1x1x128xf32> to vector<128xf32>
    %42 = vector.shape_cast %41 : vector<128xf32> to vector<1x128xf32>
    %43 = vector.broadcast %42 : vector<1x128xf32> to vector<8x128xf32>
    %44 = arith.mulf %9, %43 : vector<8x128xf32>
    %45 = arith.addf %39, %44 : vector<8x128xf32>
    %c120_i32 = arith.constant 120 : i32
    %46 = tpu.dynamic_rotate %9 by %c120_i32 dim 1 : vector<8x128xf32>, i32 -> vector<8x128xf32>
    %c0_15 = arith.constant 0 : index
    %c5 = arith.constant 5 : index
    %c0_16 = arith.constant 0 : index
    %47 = vector.load %arg2[%c0_15, %c5, %c0_16] : memref<3x27x128xf32, #tpu.memory_space<vmem>>, vector<1x1x128xf32>
    %48 = vector.shape_cast %47 : vector<1x1x128xf32> to vector<128xf32>
    %49 = vector.shape_cast %48 : vector<128xf32> to vector<1x128xf32>
    %50 = vector.broadcast %49 : vector<1x128xf32> to vector<8x128xf32>
    %51 = arith.mulf %46, %50 : vector<8x128xf32>
    %52 = arith.addf %45, %51 : vector<8x128xf32>
    %c104_i32 = arith.constant 104 : i32
    %53 = tpu.dynamic_rotate %9 by %c104_i32 dim 1 : vector<8x128xf32>, i32 -> vector<8x128xf32>
    %c0_17 = arith.constant 0 : index
    %c6 = arith.constant 6 : index
    %c0_18 = arith.constant 0 : index
    %54 = vector.load %arg2[%c0_17, %c6, %c0_18] : memref<3x27x128xf32, #tpu.memory_space<vmem>>, vector<1x1x128xf32>
    %55 = vector.shape_cast %54 : vector<1x1x128xf32> to vector<128xf32>
    %56 = vector.shape_cast %55 : vector<128xf32> to vector<1x128xf32>
    %57 = vector.broadcast %56 : vector<1x128xf32> to vector<8x128xf32>
    %58 = arith.mulf %53, %57 : vector<8x128xf32>
    %59 = arith.addf %52, %58 : vector<8x128xf32>
    %c96_i32 = arith.constant 96 : i32
    %60 = tpu.dynamic_rotate %9 by %c96_i32 dim 1 : vector<8x128xf32>, i32 -> vector<8x128xf32>
    %c0_19 = arith.constant 0 : index
    %c7 = arith.constant 7 : index
    %c0_20 = arith.constant 0 : index
    %61 = vector.load %arg2[%c0_19, %c7, %c0_20] : memref<3x27x128xf32, #tpu.memory_space<vmem>>, vector<1x1x128xf32>
    %62 = vector.shape_cast %61 : vector<1x1x128xf32> to vector<128xf32>
    %63 = vector.shape_cast %62 : vector<128xf32> to vector<1x128xf32>
    %64 = vector.broadcast %63 : vector<1x128xf32> to vector<8x128xf32>
    %65 = arith.mulf %60, %64 : vector<8x128xf32>
    %66 = arith.addf %59, %65 : vector<8x128xf32>
    %c88_i32 = arith.constant 88 : i32
    %67 = tpu.dynamic_rotate %9 by %c88_i32 dim 1 : vector<8x128xf32>, i32 -> vector<8x128xf32>
    %c0_21 = arith.constant 0 : index
    %c8 = arith.constant 8 : index
    %c0_22 = arith.constant 0 : index
    %68 = vector.load %arg2[%c0_21, %c8, %c0_22] : memref<3x27x128xf32, #tpu.memory_space<vmem>>, vector<1x1x128xf32>
    %69 = vector.shape_cast %68 : vector<1x1x128xf32> to vector<128xf32>
    %70 = vector.shape_cast %69 : vector<128xf32> to vector<1x128xf32>
    %71 = vector.broadcast %70 : vector<1x128xf32> to vector<8x128xf32>
    %72 = arith.mulf %67, %71 : vector<8x128xf32>
    %73 = arith.addf %66, %72 : vector<8x128xf32>
    %c40_i32_23 = arith.constant 40 : i32
    %74 = tpu.dynamic_rotate %1 by %c40_i32_23 dim 1 : vector<8x128xf32>, i32 -> vector<8x128xf32>
    %c0_24 = arith.constant 0 : index
    %c9 = arith.constant 9 : index
    %c0_25 = arith.constant 0 : index
    %75 = vector.load %arg2[%c0_24, %c9, %c0_25] : memref<3x27x128xf32, #tpu.memory_space<vmem>>, vector<1x1x128xf32>
    %76 = vector.shape_cast %75 : vector<1x1x128xf32> to vector<128xf32>
    %77 = vector.shape_cast %76 : vector<128xf32> to vector<1x128xf32>
    %78 = vector.broadcast %77 : vector<1x128xf32> to vector<8x128xf32>
    %79 = arith.mulf %74, %78 : vector<8x128xf32>
    %80 = arith.addf %73, %79 : vector<8x128xf32>
    %c32_i32_26 = arith.constant 32 : i32
    %81 = tpu.dynamic_rotate %1 by %c32_i32_26 dim 1 : vector<8x128xf32>, i32 -> vector<8x128xf32>
    %c0_27 = arith.constant 0 : index
    %c10 = arith.constant 10 : index
    %c0_28 = arith.constant 0 : index
    %82 = vector.load %arg2[%c0_27, %c10, %c0_28] : memref<3x27x128xf32, #tpu.memory_space<vmem>>, vector<1x1x128xf32>
    %83 = vector.shape_cast %82 : vector<1x1x128xf32> to vector<128xf32>
    %84 = vector.shape_cast %83 : vector<128xf32> to vector<1x128xf32>
    %85 = vector.broadcast %84 : vector<1x128xf32> to vector<8x128xf32>
    %86 = arith.mulf %81, %85 : vector<8x128xf32>
    %87 = arith.addf %80, %86 : vector<8x128xf32>
    %c24_i32_29 = arith.constant 24 : i32
    %88 = tpu.dynamic_rotate %1 by %c24_i32_29 dim 1 : vector<8x128xf32>, i32 -> vector<8x128xf32>
    %c0_30 = arith.constant 0 : index
    %c11 = arith.constant 11 : index
    %c0_31 = arith.constant 0 : index
    %89 = vector.load %arg2[%c0_30, %c11, %c0_31] : memref<3x27x128xf32, #tpu.memory_space<vmem>>, vector<1x1x128xf32>
    %90 = vector.shape_cast %89 : vector<1x1x128xf32> to vector<128xf32>
    %91 = vector.shape_cast %90 : vector<128xf32> to vector<1x128xf32>
    %92 = vector.broadcast %91 : vector<1x128xf32> to vector<8x128xf32>
    %93 = arith.mulf %88, %92 : vector<8x128xf32>
    %94 = arith.addf %87, %93 : vector<8x128xf32>
    %c8_i32_32 = arith.constant 8 : i32
    %95 = tpu.dynamic_rotate %1 by %c8_i32_32 dim 1 : vector<8x128xf32>, i32 -> vector<8x128xf32>
    %c0_33 = arith.constant 0 : index
    %c12 = arith.constant 12 : index
    %c0_34 = arith.constant 0 : index
    %96 = vector.load %arg2[%c0_33, %c12, %c0_34] : memref<3x27x128xf32, #tpu.memory_space<vmem>>, vector<1x1x128xf32>
    %97 = vector.shape_cast %96 : vector<1x1x128xf32> to vector<128xf32>
    %98 = vector.shape_cast %97 : vector<128xf32> to vector<1x128xf32>
    %99 = vector.broadcast %98 : vector<1x128xf32> to vector<8x128xf32>
    %100 = arith.mulf %95, %99 : vector<8x128xf32>
    %101 = arith.addf %94, %100 : vector<8x128xf32>
    %c0_35 = arith.constant 0 : index
    %c13 = arith.constant 13 : index
    %c0_36 = arith.constant 0 : index
    %102 = vector.load %arg2[%c0_35, %c13, %c0_36] : memref<3x27x128xf32, #tpu.memory_space<vmem>>, vector<1x1x128xf32>
    %103 = vector.shape_cast %102 : vector<1x1x128xf32> to vector<128xf32>
    %104 = vector.shape_cast %103 : vector<128xf32> to vector<1x128xf32>
    %105 = vector.broadcast %104 : vector<1x128xf32> to vector<8x128xf32>
    %106 = arith.mulf %1, %105 : vector<8x128xf32>
    %107 = arith.addf %101, %106 : vector<8x128xf32>
    %c120_i32_37 = arith.constant 120 : i32
    %108 = tpu.dynamic_rotate %1 by %c120_i32_37 dim 1 : vector<8x128xf32>, i32 -> vector<8x128xf32>
    %c0_38 = arith.constant 0 : index
    %c14 = arith.constant 14 : index
    %c0_39 = arith.constant 0 : index
    %109 = vector.load %arg2[%c0_38, %c14, %c0_39] : memref<3x27x128xf32, #tpu.memory_space<vmem>>, vector<1x1x128xf32>
    %110 = vector.shape_cast %109 : vector<1x1x128xf32> to vector<128xf32>
    %111 = vector.shape_cast %110 : vector<128xf32> to vector<1x128xf32>
    %112 = vector.broadcast %111 : vector<1x128xf32> to vector<8x128xf32>
    %113 = arith.mulf %108, %112 : vector<8x128xf32>
    %114 = arith.addf %107, %113 : vector<8x128xf32>
    %c104_i32_40 = arith.constant 104 : i32
    %115 = tpu.dynamic_rotate %1 by %c104_i32_40 dim 1 : vector<8x128xf32>, i32 -> vector<8x128xf32>
    %c0_41 = arith.constant 0 : index
    %c15 = arith.constant 15 : index
    %c0_42 = arith.constant 0 : index
    %116 = vector.load %arg2[%c0_41, %c15, %c0_42] : memref<3x27x128xf32, #tpu.memory_space<vmem>>, vector<1x1x128xf32>
    %117 = vector.shape_cast %116 : vector<1x1x128xf32> to vector<128xf32>
    %118 = vector.shape_cast %117 : vector<128xf32> to vector<1x128xf32>
    %119 = vector.broadcast %118 : vector<1x128xf32> to vector<8x128xf32>
    %120 = arith.mulf %115, %119 : vector<8x128xf32>
    %121 = arith.addf %114, %120 : vector<8x128xf32>
    %c96_i32_43 = arith.constant 96 : i32
    %122 = tpu.dynamic_rotate %1 by %c96_i32_43 dim 1 : vector<8x128xf32>, i32 -> vector<8x128xf32>
    %c0_44 = arith.constant 0 : index
    %c16 = arith.constant 16 : index
    %c0_45 = arith.constant 0 : index
    %123 = vector.load %arg2[%c0_44, %c16, %c0_45] : memref<3x27x128xf32, #tpu.memory_space<vmem>>, vector<1x1x128xf32>
    %124 = vector.shape_cast %123 : vector<1x1x128xf32> to vector<128xf32>
    %125 = vector.shape_cast %124 : vector<128xf32> to vector<1x128xf32>
    %126 = vector.broadcast %125 : vector<1x128xf32> to vector<8x128xf32>
    %127 = arith.mulf %122, %126 : vector<8x128xf32>
    %128 = arith.addf %121, %127 : vector<8x128xf32>
    %c88_i32_46 = arith.constant 88 : i32
    %129 = tpu.dynamic_rotate %1 by %c88_i32_46 dim 1 : vector<8x128xf32>, i32 -> vector<8x128xf32>
    %c0_47 = arith.constant 0 : index
    %c17 = arith.constant 17 : index
    %c0_48 = arith.constant 0 : index
    %130 = vector.load %arg2[%c0_47, %c17, %c0_48] : memref<3x27x128xf32, #tpu.memory_space<vmem>>, vector<1x1x128xf32>
    %131 = vector.shape_cast %130 : vector<1x1x128xf32> to vector<128xf32>
    %132 = vector.shape_cast %131 : vector<128xf32> to vector<1x128xf32>
    %133 = vector.broadcast %132 : vector<1x128xf32> to vector<8x128xf32>
    %134 = arith.mulf %129, %133 : vector<8x128xf32>
    %135 = arith.addf %128, %134 : vector<8x128xf32>
    %c40_i32_49 = arith.constant 40 : i32
    %136 = tpu.dynamic_rotate %12 by %c40_i32_49 dim 1 : vector<8x128xf32>, i32 -> vector<8x128xf32>
    %c0_50 = arith.constant 0 : index
    %c18 = arith.constant 18 : index
    %c0_51 = arith.constant 0 : index
    %137 = vector.load %arg2[%c0_50, %c18, %c0_51] : memref<3x27x128xf32, #tpu.memory_space<vmem>>, vector<1x1x128xf32>
    %138 = vector.shape_cast %137 : vector<1x1x128xf32> to vector<128xf32>
    %139 = vector.shape_cast %138 : vector<128xf32> to vector<1x128xf32>
    %140 = vector.broadcast %139 : vector<1x128xf32> to vector<8x128xf32>
    %141 = arith.mulf %136, %140 : vector<8x128xf32>
    %142 = arith.addf %135, %141 : vector<8x128xf32>
    %c32_i32_52 = arith.constant 32 : i32
    %143 = tpu.dynamic_rotate %12 by %c32_i32_52 dim 1 : vector<8x128xf32>, i32 -> vector<8x128xf32>
    %c0_53 = arith.constant 0 : index
    %c19 = arith.constant 19 : index
    %c0_54 = arith.constant 0 : index
    %144 = vector.load %arg2[%c0_53, %c19, %c0_54] : memref<3x27x128xf32, #tpu.memory_space<vmem>>, vector<1x1x128xf32>
    %145 = vector.shape_cast %144 : vector<1x1x128xf32> to vector<128xf32>
    %146 = vector.shape_cast %145 : vector<128xf32> to vector<1x128xf32>
    %147 = vector.broadcast %146 : vector<1x128xf32> to vector<8x128xf32>
    %148 = arith.mulf %143, %147 : vector<8x128xf32>
    %149 = arith.addf %142, %148 : vector<8x128xf32>
    %c24_i32_55 = arith.constant 24 : i32
    %150 = tpu.dynamic_rotate %12 by %c24_i32_55 dim 1 : vector<8x128xf32>, i32 -> vector<8x128xf32>
    %c0_56 = arith.constant 0 : index
    %c20 = arith.constant 20 : index
    %c0_57 = arith.constant 0 : index
    %151 = vector.load %arg2[%c0_56, %c20, %c0_57] : memref<3x27x128xf32, #tpu.memory_space<vmem>>, vector<1x1x128xf32>
    %152 = vector.shape_cast %151 : vector<1x1x128xf32> to vector<128xf32>
    %153 = vector.shape_cast %152 : vector<128xf32> to vector<1x128xf32>
    %154 = vector.broadcast %153 : vector<1x128xf32> to vector<8x128xf32>
    %155 = arith.mulf %150, %154 : vector<8x128xf32>
    %156 = arith.addf %149, %155 : vector<8x128xf32>
    %c8_i32_58 = arith.constant 8 : i32
    %157 = tpu.dynamic_rotate %12 by %c8_i32_58 dim 1 : vector<8x128xf32>, i32 -> vector<8x128xf32>
    %c0_59 = arith.constant 0 : index
    %c21 = arith.constant 21 : index
    %c0_60 = arith.constant 0 : index
    %158 = vector.load %arg2[%c0_59, %c21, %c0_60] : memref<3x27x128xf32, #tpu.memory_space<vmem>>, vector<1x1x128xf32>
    %159 = vector.shape_cast %158 : vector<1x1x128xf32> to vector<128xf32>
    %160 = vector.shape_cast %159 : vector<128xf32> to vector<1x128xf32>
    %161 = vector.broadcast %160 : vector<1x128xf32> to vector<8x128xf32>
    %162 = arith.mulf %157, %161 : vector<8x128xf32>
    %163 = arith.addf %156, %162 : vector<8x128xf32>
    %c0_61 = arith.constant 0 : index
    %c22 = arith.constant 22 : index
    %c0_62 = arith.constant 0 : index
    %164 = vector.load %arg2[%c0_61, %c22, %c0_62] : memref<3x27x128xf32, #tpu.memory_space<vmem>>, vector<1x1x128xf32>
    %165 = vector.shape_cast %164 : vector<1x1x128xf32> to vector<128xf32>
    %166 = vector.shape_cast %165 : vector<128xf32> to vector<1x128xf32>
    %167 = vector.broadcast %166 : vector<1x128xf32> to vector<8x128xf32>
    %168 = arith.mulf %12, %167 : vector<8x128xf32>
    %169 = arith.addf %163, %168 : vector<8x128xf32>
    %c120_i32_63 = arith.constant 120 : i32
    %170 = tpu.dynamic_rotate %12 by %c120_i32_63 dim 1 : vector<8x128xf32>, i32 -> vector<8x128xf32>
    %c0_64 = arith.constant 0 : index
    %c23 = arith.constant 23 : index
    %c0_65 = arith.constant 0 : index
    %171 = vector.load %arg2[%c0_64, %c23, %c0_65] : memref<3x27x128xf32, #tpu.memory_space<vmem>>, vector<1x1x128xf32>
    %172 = vector.shape_cast %171 : vector<1x1x128xf32> to vector<128xf32>
    %173 = vector.shape_cast %172 : vector<128xf32> to vector<1x128xf32>
    %174 = vector.broadcast %173 : vector<1x128xf32> to vector<8x128xf32>
    %175 = arith.mulf %170, %174 : vector<8x128xf32>
    %176 = arith.addf %169, %175 : vector<8x128xf32>
    %c104_i32_66 = arith.constant 104 : i32
    %177 = tpu.dynamic_rotate %12 by %c104_i32_66 dim 1 : vector<8x128xf32>, i32 -> vector<8x128xf32>
    %c0_67 = arith.constant 0 : index
    %c24 = arith.constant 24 : index
    %c0_68 = arith.constant 0 : index
    %178 = vector.load %arg2[%c0_67, %c24, %c0_68] : memref<3x27x128xf32, #tpu.memory_space<vmem>>, vector<1x1x128xf32>
    %179 = vector.shape_cast %178 : vector<1x1x128xf32> to vector<128xf32>
    %180 = vector.shape_cast %179 : vector<128xf32> to vector<1x128xf32>
    %181 = vector.broadcast %180 : vector<1x128xf32> to vector<8x128xf32>
    %182 = arith.mulf %177, %181 : vector<8x128xf32>
    %183 = arith.addf %176, %182 : vector<8x128xf32>
    %c96_i32_69 = arith.constant 96 : i32
    %184 = tpu.dynamic_rotate %12 by %c96_i32_69 dim 1 : vector<8x128xf32>, i32 -> vector<8x128xf32>
    %c0_70 = arith.constant 0 : index
    %c25 = arith.constant 25 : index
    %c0_71 = arith.constant 0 : index
    %185 = vector.load %arg2[%c0_70, %c25, %c0_71] : memref<3x27x128xf32, #tpu.memory_space<vmem>>, vector<1x1x128xf32>
    %186 = vector.shape_cast %185 : vector<1x1x128xf32> to vector<128xf32>
    %187 = vector.shape_cast %186 : vector<128xf32> to vector<1x128xf32>
    %188 = vector.broadcast %187 : vector<1x128xf32> to vector<8x128xf32>
    %189 = arith.mulf %184, %188 : vector<8x128xf32>
    %190 = arith.addf %183, %189 : vector<8x128xf32>
    %c88_i32_72 = arith.constant 88 : i32
    %191 = tpu.dynamic_rotate %12 by %c88_i32_72 dim 1 : vector<8x128xf32>, i32 -> vector<8x128xf32>
    %c0_73 = arith.constant 0 : index
    %c26 = arith.constant 26 : index
    %c0_74 = arith.constant 0 : index
    %192 = vector.load %arg2[%c0_73, %c26, %c0_74] : memref<3x27x128xf32, #tpu.memory_space<vmem>>, vector<1x1x128xf32>
    %193 = vector.shape_cast %192 : vector<1x1x128xf32> to vector<128xf32>
    %194 = vector.shape_cast %193 : vector<128xf32> to vector<1x128xf32>
    %195 = vector.broadcast %194 : vector<1x128xf32> to vector<8x128xf32>
    %196 = arith.mulf %191, %195 : vector<8x128xf32>
    %197 = arith.addf %190, %196 : vector<8x128xf32>
    %c0_75 = arith.constant 0 : index
    %c0_76 = arith.constant 0 : index
    %c0_77 = arith.constant 0 : index
    %198 = vector.load %arg3[%c0_75, %c0_76, %c0_77] : memref<3x128x128xf32, #tpu.memory_space<vmem>>, vector<1x128x128xf32>
    %199 = vector.shape_cast %198 : vector<1x128x128xf32> to vector<128x128xf32>
    %cst_78 = arith.constant dense<0.000000e+00> : vector<8x128xf32>
    %200 = tpu.matmul %197, %199, %cst_78 {dimension_numbers = #tpu.dot_dimension_numbers<[1], [0], [0], [1], [0, 0, 1, 1], [], []>} : vector<8x128xf32>, vector<128x128xf32>, vector<8x128xf32> -> vector<8x128xf32>
    %c0_79 = arith.constant 0 : index
    %c0_80 = arith.constant 0 : index
    %201 = vector.load %arg4[%c0_79, %c0_80] : memref<3x128xf32, #tpu.memory_space<vmem>>, vector<1x128xf32>
    %202 = vector.shape_cast %201 : vector<1x128xf32> to vector<128xf32>
    %203 = vector.shape_cast %202 : vector<128xf32> to vector<1x128xf32>
    %204 = vector.broadcast %203 : vector<1x128xf32> to vector<8x128xf32>
    %205 = arith.addf %200, %204 : vector<8x128xf32>
    %cst_81 = arith.constant 0.000000e+00 : f32
    %206 = vector.broadcast %cst_81 : f32 to vector<8x128xf32>
    %207 = arith.maximumf %205, %206 : vector<8x128xf32>
    %c1_i32_82 = arith.constant 1 : i32
    %208 = tpu.dynamic_rotate %207 by %c1_i32_82 dim 0 : vector<8x128xf32>, i32 -> vector<8x128xf32>
    %cst_83 = arith.constant 0.000000e+00 : f32
    %209 = vector.broadcast %cst_83 : f32 to vector<8x128xf32>
    %210 = arith.select %4, %208, %209 : vector<8x128xi1>, vector<8x128xf32>
    %c7_i32_84 = arith.constant 7 : i32
    %211 = tpu.dynamic_rotate %207 by %c7_i32_84 dim 0 : vector<8x128xf32>, i32 -> vector<8x128xf32>
    %cst_85 = arith.constant 0.000000e+00 : f32
    %212 = vector.broadcast %cst_85 : f32 to vector<8x128xf32>
    %213 = arith.select %6, %211, %212 : vector<8x128xi1>, vector<8x128xf32>
    %c40_i32_86 = arith.constant 40 : i32
    %214 = tpu.dynamic_rotate %210 by %c40_i32_86 dim 1 : vector<8x128xf32>, i32 -> vector<8x128xf32>
    %c1_87 = arith.constant 1 : index
    %c0_88 = arith.constant 0 : index
    %c0_89 = arith.constant 0 : index
    %215 = vector.load %arg2[%c1_87, %c0_88, %c0_89] : memref<3x27x128xf32, #tpu.memory_space<vmem>>, vector<1x1x128xf32>
    %216 = vector.shape_cast %215 : vector<1x1x128xf32> to vector<128xf32>
    %217 = vector.shape_cast %216 : vector<128xf32> to vector<1x128xf32>
    %218 = vector.broadcast %217 : vector<1x128xf32> to vector<8x128xf32>
    %219 = arith.mulf %214, %218 : vector<8x128xf32>
    %c32_i32_90 = arith.constant 32 : i32
    %220 = tpu.dynamic_rotate %210 by %c32_i32_90 dim 1 : vector<8x128xf32>, i32 -> vector<8x128xf32>
    %c1_91 = arith.constant 1 : index
    %c1_92 = arith.constant 1 : index
    %c0_93 = arith.constant 0 : index
    %221 = vector.load %arg2[%c1_91, %c1_92, %c0_93] : memref<3x27x128xf32, #tpu.memory_space<vmem>>, vector<1x1x128xf32>
    %222 = vector.shape_cast %221 : vector<1x1x128xf32> to vector<128xf32>
    %223 = vector.shape_cast %222 : vector<128xf32> to vector<1x128xf32>
    %224 = vector.broadcast %223 : vector<1x128xf32> to vector<8x128xf32>
    %225 = arith.mulf %220, %224 : vector<8x128xf32>
    %226 = arith.addf %219, %225 : vector<8x128xf32>
    %c24_i32_94 = arith.constant 24 : i32
    %227 = tpu.dynamic_rotate %210 by %c24_i32_94 dim 1 : vector<8x128xf32>, i32 -> vector<8x128xf32>
    %c1_95 = arith.constant 1 : index
    %c2_96 = arith.constant 2 : index
    %c0_97 = arith.constant 0 : index
    %228 = vector.load %arg2[%c1_95, %c2_96, %c0_97] : memref<3x27x128xf32, #tpu.memory_space<vmem>>, vector<1x1x128xf32>
    %229 = vector.shape_cast %228 : vector<1x1x128xf32> to vector<128xf32>
    %230 = vector.shape_cast %229 : vector<128xf32> to vector<1x128xf32>
    %231 = vector.broadcast %230 : vector<1x128xf32> to vector<8x128xf32>
    %232 = arith.mulf %227, %231 : vector<8x128xf32>
    %233 = arith.addf %226, %232 : vector<8x128xf32>
    %c8_i32_98 = arith.constant 8 : i32
    %234 = tpu.dynamic_rotate %210 by %c8_i32_98 dim 1 : vector<8x128xf32>, i32 -> vector<8x128xf32>
    %c1_99 = arith.constant 1 : index
    %c3_100 = arith.constant 3 : index
    %c0_101 = arith.constant 0 : index
    %235 = vector.load %arg2[%c1_99, %c3_100, %c0_101] : memref<3x27x128xf32, #tpu.memory_space<vmem>>, vector<1x1x128xf32>
    %236 = vector.shape_cast %235 : vector<1x1x128xf32> to vector<128xf32>
    %237 = vector.shape_cast %236 : vector<128xf32> to vector<1x128xf32>
    %238 = vector.broadcast %237 : vector<1x128xf32> to vector<8x128xf32>
    %239 = arith.mulf %234, %238 : vector<8x128xf32>
    %240 = arith.addf %233, %239 : vector<8x128xf32>
    %c1_102 = arith.constant 1 : index
    %c4_103 = arith.constant 4 : index
    %c0_104 = arith.constant 0 : index
    %241 = vector.load %arg2[%c1_102, %c4_103, %c0_104] : memref<3x27x128xf32, #tpu.memory_space<vmem>>, vector<1x1x128xf32>
    %242 = vector.shape_cast %241 : vector<1x1x128xf32> to vector<128xf32>
    %243 = vector.shape_cast %242 : vector<128xf32> to vector<1x128xf32>
    %244 = vector.broadcast %243 : vector<1x128xf32> to vector<8x128xf32>
    %245 = arith.mulf %210, %244 : vector<8x128xf32>
    %246 = arith.addf %240, %245 : vector<8x128xf32>
    %c120_i32_105 = arith.constant 120 : i32
    %247 = tpu.dynamic_rotate %210 by %c120_i32_105 dim 1 : vector<8x128xf32>, i32 -> vector<8x128xf32>
    %c1_106 = arith.constant 1 : index
    %c5_107 = arith.constant 5 : index
    %c0_108 = arith.constant 0 : index
    %248 = vector.load %arg2[%c1_106, %c5_107, %c0_108] : memref<3x27x128xf32, #tpu.memory_space<vmem>>, vector<1x1x128xf32>
    %249 = vector.shape_cast %248 : vector<1x1x128xf32> to vector<128xf32>
    %250 = vector.shape_cast %249 : vector<128xf32> to vector<1x128xf32>
    %251 = vector.broadcast %250 : vector<1x128xf32> to vector<8x128xf32>
    %252 = arith.mulf %247, %251 : vector<8x128xf32>
    %253 = arith.addf %246, %252 : vector<8x128xf32>
    %c104_i32_109 = arith.constant 104 : i32
    %254 = tpu.dynamic_rotate %210 by %c104_i32_109 dim 1 : vector<8x128xf32>, i32 -> vector<8x128xf32>
    %c1_110 = arith.constant 1 : index
    %c6_111 = arith.constant 6 : index
    %c0_112 = arith.constant 0 : index
    %255 = vector.load %arg2[%c1_110, %c6_111, %c0_112] : memref<3x27x128xf32, #tpu.memory_space<vmem>>, vector<1x1x128xf32>
    %256 = vector.shape_cast %255 : vector<1x1x128xf32> to vector<128xf32>
    %257 = vector.shape_cast %256 : vector<128xf32> to vector<1x128xf32>
    %258 = vector.broadcast %257 : vector<1x128xf32> to vector<8x128xf32>
    %259 = arith.mulf %254, %258 : vector<8x128xf32>
    %260 = arith.addf %253, %259 : vector<8x128xf32>
    %c96_i32_113 = arith.constant 96 : i32
    %261 = tpu.dynamic_rotate %210 by %c96_i32_113 dim 1 : vector<8x128xf32>, i32 -> vector<8x128xf32>
    %c1_114 = arith.constant 1 : index
    %c7_115 = arith.constant 7 : index
    %c0_116 = arith.constant 0 : index
    %262 = vector.load %arg2[%c1_114, %c7_115, %c0_116] : memref<3x27x128xf32, #tpu.memory_space<vmem>>, vector<1x1x128xf32>
    %263 = vector.shape_cast %262 : vector<1x1x128xf32> to vector<128xf32>
    %264 = vector.shape_cast %263 : vector<128xf32> to vector<1x128xf32>
    %265 = vector.broadcast %264 : vector<1x128xf32> to vector<8x128xf32>
    %266 = arith.mulf %261, %265 : vector<8x128xf32>
    %267 = arith.addf %260, %266 : vector<8x128xf32>
    %c88_i32_117 = arith.constant 88 : i32
    %268 = tpu.dynamic_rotate %210 by %c88_i32_117 dim 1 : vector<8x128xf32>, i32 -> vector<8x128xf32>
    %c1_118 = arith.constant 1 : index
    %c8_119 = arith.constant 8 : index
    %c0_120 = arith.constant 0 : index
    %269 = vector.load %arg2[%c1_118, %c8_119, %c0_120] : memref<3x27x128xf32, #tpu.memory_space<vmem>>, vector<1x1x128xf32>
    %270 = vector.shape_cast %269 : vector<1x1x128xf32> to vector<128xf32>
    %271 = vector.shape_cast %270 : vector<128xf32> to vector<1x128xf32>
    %272 = vector.broadcast %271 : vector<1x128xf32> to vector<8x128xf32>
    %273 = arith.mulf %268, %272 : vector<8x128xf32>
    %274 = arith.addf %267, %273 : vector<8x128xf32>
    %c40_i32_121 = arith.constant 40 : i32
    %275 = tpu.dynamic_rotate %207 by %c40_i32_121 dim 1 : vector<8x128xf32>, i32 -> vector<8x128xf32>
    %c1_122 = arith.constant 1 : index
    %c9_123 = arith.constant 9 : index
    %c0_124 = arith.constant 0 : index
    %276 = vector.load %arg2[%c1_122, %c9_123, %c0_124] : memref<3x27x128xf32, #tpu.memory_space<vmem>>, vector<1x1x128xf32>
    %277 = vector.shape_cast %276 : vector<1x1x128xf32> to vector<128xf32>
    %278 = vector.shape_cast %277 : vector<128xf32> to vector<1x128xf32>
    %279 = vector.broadcast %278 : vector<1x128xf32> to vector<8x128xf32>
    %280 = arith.mulf %275, %279 : vector<8x128xf32>
    %281 = arith.addf %274, %280 : vector<8x128xf32>
    %c32_i32_125 = arith.constant 32 : i32
    %282 = tpu.dynamic_rotate %207 by %c32_i32_125 dim 1 : vector<8x128xf32>, i32 -> vector<8x128xf32>
    %c1_126 = arith.constant 1 : index
    %c10_127 = arith.constant 10 : index
    %c0_128 = arith.constant 0 : index
    %283 = vector.load %arg2[%c1_126, %c10_127, %c0_128] : memref<3x27x128xf32, #tpu.memory_space<vmem>>, vector<1x1x128xf32>
    %284 = vector.shape_cast %283 : vector<1x1x128xf32> to vector<128xf32>
    %285 = vector.shape_cast %284 : vector<128xf32> to vector<1x128xf32>
    %286 = vector.broadcast %285 : vector<1x128xf32> to vector<8x128xf32>
    %287 = arith.mulf %282, %286 : vector<8x128xf32>
    %288 = arith.addf %281, %287 : vector<8x128xf32>
    %c24_i32_129 = arith.constant 24 : i32
    %289 = tpu.dynamic_rotate %207 by %c24_i32_129 dim 1 : vector<8x128xf32>, i32 -> vector<8x128xf32>
    %c1_130 = arith.constant 1 : index
    %c11_131 = arith.constant 11 : index
    %c0_132 = arith.constant 0 : index
    %290 = vector.load %arg2[%c1_130, %c11_131, %c0_132] : memref<3x27x128xf32, #tpu.memory_space<vmem>>, vector<1x1x128xf32>
    %291 = vector.shape_cast %290 : vector<1x1x128xf32> to vector<128xf32>
    %292 = vector.shape_cast %291 : vector<128xf32> to vector<1x128xf32>
    %293 = vector.broadcast %292 : vector<1x128xf32> to vector<8x128xf32>
    %294 = arith.mulf %289, %293 : vector<8x128xf32>
    %295 = arith.addf %288, %294 : vector<8x128xf32>
    %c8_i32_133 = arith.constant 8 : i32
    %296 = tpu.dynamic_rotate %207 by %c8_i32_133 dim 1 : vector<8x128xf32>, i32 -> vector<8x128xf32>
    %c1_134 = arith.constant 1 : index
    %c12_135 = arith.constant 12 : index
    %c0_136 = arith.constant 0 : index
    %297 = vector.load %arg2[%c1_134, %c12_135, %c0_136] : memref<3x27x128xf32, #tpu.memory_space<vmem>>, vector<1x1x128xf32>
    %298 = vector.shape_cast %297 : vector<1x1x128xf32> to vector<128xf32>
    %299 = vector.shape_cast %298 : vector<128xf32> to vector<1x128xf32>
    %300 = vector.broadcast %299 : vector<1x128xf32> to vector<8x128xf32>
    %301 = arith.mulf %296, %300 : vector<8x128xf32>
    %302 = arith.addf %295, %301 : vector<8x128xf32>
    %c1_137 = arith.constant 1 : index
    %c13_138 = arith.constant 13 : index
    %c0_139 = arith.constant 0 : index
    %303 = vector.load %arg2[%c1_137, %c13_138, %c0_139] : memref<3x27x128xf32, #tpu.memory_space<vmem>>, vector<1x1x128xf32>
    %304 = vector.shape_cast %303 : vector<1x1x128xf32> to vector<128xf32>
    %305 = vector.shape_cast %304 : vector<128xf32> to vector<1x128xf32>
    %306 = vector.broadcast %305 : vector<1x128xf32> to vector<8x128xf32>
    %307 = arith.mulf %207, %306 : vector<8x128xf32>
    %308 = arith.addf %302, %307 : vector<8x128xf32>
    %c120_i32_140 = arith.constant 120 : i32
    %309 = tpu.dynamic_rotate %207 by %c120_i32_140 dim 1 : vector<8x128xf32>, i32 -> vector<8x128xf32>
    %c1_141 = arith.constant 1 : index
    %c14_142 = arith.constant 14 : index
    %c0_143 = arith.constant 0 : index
    %310 = vector.load %arg2[%c1_141, %c14_142, %c0_143] : memref<3x27x128xf32, #tpu.memory_space<vmem>>, vector<1x1x128xf32>
    %311 = vector.shape_cast %310 : vector<1x1x128xf32> to vector<128xf32>
    %312 = vector.shape_cast %311 : vector<128xf32> to vector<1x128xf32>
    %313 = vector.broadcast %312 : vector<1x128xf32> to vector<8x128xf32>
    %314 = arith.mulf %309, %313 : vector<8x128xf32>
    %315 = arith.addf %308, %314 : vector<8x128xf32>
    %c104_i32_144 = arith.constant 104 : i32
    %316 = tpu.dynamic_rotate %207 by %c104_i32_144 dim 1 : vector<8x128xf32>, i32 -> vector<8x128xf32>
    %c1_145 = arith.constant 1 : index
    %c15_146 = arith.constant 15 : index
    %c0_147 = arith.constant 0 : index
    %317 = vector.load %arg2[%c1_145, %c15_146, %c0_147] : memref<3x27x128xf32, #tpu.memory_space<vmem>>, vector<1x1x128xf32>
    %318 = vector.shape_cast %317 : vector<1x1x128xf32> to vector<128xf32>
    %319 = vector.shape_cast %318 : vector<128xf32> to vector<1x128xf32>
    %320 = vector.broadcast %319 : vector<1x128xf32> to vector<8x128xf32>
    %321 = arith.mulf %316, %320 : vector<8x128xf32>
    %322 = arith.addf %315, %321 : vector<8x128xf32>
    %c96_i32_148 = arith.constant 96 : i32
    %323 = tpu.dynamic_rotate %207 by %c96_i32_148 dim 1 : vector<8x128xf32>, i32 -> vector<8x128xf32>
    %c1_149 = arith.constant 1 : index
    %c16_150 = arith.constant 16 : index
    %c0_151 = arith.constant 0 : index
    %324 = vector.load %arg2[%c1_149, %c16_150, %c0_151] : memref<3x27x128xf32, #tpu.memory_space<vmem>>, vector<1x1x128xf32>
    %325 = vector.shape_cast %324 : vector<1x1x128xf32> to vector<128xf32>
    %326 = vector.shape_cast %325 : vector<128xf32> to vector<1x128xf32>
    %327 = vector.broadcast %326 : vector<1x128xf32> to vector<8x128xf32>
    %328 = arith.mulf %323, %327 : vector<8x128xf32>
    %329 = arith.addf %322, %328 : vector<8x128xf32>
    %c88_i32_152 = arith.constant 88 : i32
    %330 = tpu.dynamic_rotate %207 by %c88_i32_152 dim 1 : vector<8x128xf32>, i32 -> vector<8x128xf32>
    %c1_153 = arith.constant 1 : index
    %c17_154 = arith.constant 17 : index
    %c0_155 = arith.constant 0 : index
    %331 = vector.load %arg2[%c1_153, %c17_154, %c0_155] : memref<3x27x128xf32, #tpu.memory_space<vmem>>, vector<1x1x128xf32>
    %332 = vector.shape_cast %331 : vector<1x1x128xf32> to vector<128xf32>
    %333 = vector.shape_cast %332 : vector<128xf32> to vector<1x128xf32>
    %334 = vector.broadcast %333 : vector<1x128xf32> to vector<8x128xf32>
    %335 = arith.mulf %330, %334 : vector<8x128xf32>
    %336 = arith.addf %329, %335 : vector<8x128xf32>
    %c40_i32_156 = arith.constant 40 : i32
    %337 = tpu.dynamic_rotate %213 by %c40_i32_156 dim 1 : vector<8x128xf32>, i32 -> vector<8x128xf32>
    %c1_157 = arith.constant 1 : index
    %c18_158 = arith.constant 18 : index
    %c0_159 = arith.constant 0 : index
    %338 = vector.load %arg2[%c1_157, %c18_158, %c0_159] : memref<3x27x128xf32, #tpu.memory_space<vmem>>, vector<1x1x128xf32>
    %339 = vector.shape_cast %338 : vector<1x1x128xf32> to vector<128xf32>
    %340 = vector.shape_cast %339 : vector<128xf32> to vector<1x128xf32>
    %341 = vector.broadcast %340 : vector<1x128xf32> to vector<8x128xf32>
    %342 = arith.mulf %337, %341 : vector<8x128xf32>
    %343 = arith.addf %336, %342 : vector<8x128xf32>
    %c32_i32_160 = arith.constant 32 : i32
    %344 = tpu.dynamic_rotate %213 by %c32_i32_160 dim 1 : vector<8x128xf32>, i32 -> vector<8x128xf32>
    %c1_161 = arith.constant 1 : index
    %c19_162 = arith.constant 19 : index
    %c0_163 = arith.constant 0 : index
    %345 = vector.load %arg2[%c1_161, %c19_162, %c0_163] : memref<3x27x128xf32, #tpu.memory_space<vmem>>, vector<1x1x128xf32>
    %346 = vector.shape_cast %345 : vector<1x1x128xf32> to vector<128xf32>
    %347 = vector.shape_cast %346 : vector<128xf32> to vector<1x128xf32>
    %348 = vector.broadcast %347 : vector<1x128xf32> to vector<8x128xf32>
    %349 = arith.mulf %344, %348 : vector<8x128xf32>
    %350 = arith.addf %343, %349 : vector<8x128xf32>
    %c24_i32_164 = arith.constant 24 : i32
    %351 = tpu.dynamic_rotate %213 by %c24_i32_164 dim 1 : vector<8x128xf32>, i32 -> vector<8x128xf32>
    %c1_165 = arith.constant 1 : index
    %c20_166 = arith.constant 20 : index
    %c0_167 = arith.constant 0 : index
    %352 = vector.load %arg2[%c1_165, %c20_166, %c0_167] : memref<3x27x128xf32, #tpu.memory_space<vmem>>, vector<1x1x128xf32>
    %353 = vector.shape_cast %352 : vector<1x1x128xf32> to vector<128xf32>
    %354 = vector.shape_cast %353 : vector<128xf32> to vector<1x128xf32>
    %355 = vector.broadcast %354 : vector<1x128xf32> to vector<8x128xf32>
    %356 = arith.mulf %351, %355 : vector<8x128xf32>
    %357 = arith.addf %350, %356 : vector<8x128xf32>
    %c8_i32_168 = arith.constant 8 : i32
    %358 = tpu.dynamic_rotate %213 by %c8_i32_168 dim 1 : vector<8x128xf32>, i32 -> vector<8x128xf32>
    %c1_169 = arith.constant 1 : index
    %c21_170 = arith.constant 21 : index
    %c0_171 = arith.constant 0 : index
    %359 = vector.load %arg2[%c1_169, %c21_170, %c0_171] : memref<3x27x128xf32, #tpu.memory_space<vmem>>, vector<1x1x128xf32>
    %360 = vector.shape_cast %359 : vector<1x1x128xf32> to vector<128xf32>
    %361 = vector.shape_cast %360 : vector<128xf32> to vector<1x128xf32>
    %362 = vector.broadcast %361 : vector<1x128xf32> to vector<8x128xf32>
    %363 = arith.mulf %358, %362 : vector<8x128xf32>
    %364 = arith.addf %357, %363 : vector<8x128xf32>
    %c1_172 = arith.constant 1 : index
    %c22_173 = arith.constant 22 : index
    %c0_174 = arith.constant 0 : index
    %365 = vector.load %arg2[%c1_172, %c22_173, %c0_174] : memref<3x27x128xf32, #tpu.memory_space<vmem>>, vector<1x1x128xf32>
    %366 = vector.shape_cast %365 : vector<1x1x128xf32> to vector<128xf32>
    %367 = vector.shape_cast %366 : vector<128xf32> to vector<1x128xf32>
    %368 = vector.broadcast %367 : vector<1x128xf32> to vector<8x128xf32>
    %369 = arith.mulf %213, %368 : vector<8x128xf32>
    %370 = arith.addf %364, %369 : vector<8x128xf32>
    %c120_i32_175 = arith.constant 120 : i32
    %371 = tpu.dynamic_rotate %213 by %c120_i32_175 dim 1 : vector<8x128xf32>, i32 -> vector<8x128xf32>
    %c1_176 = arith.constant 1 : index
    %c23_177 = arith.constant 23 : index
    %c0_178 = arith.constant 0 : index
    %372 = vector.load %arg2[%c1_176, %c23_177, %c0_178] : memref<3x27x128xf32, #tpu.memory_space<vmem>>, vector<1x1x128xf32>
    %373 = vector.shape_cast %372 : vector<1x1x128xf32> to vector<128xf32>
    %374 = vector.shape_cast %373 : vector<128xf32> to vector<1x128xf32>
    %375 = vector.broadcast %374 : vector<1x128xf32> to vector<8x128xf32>
    %376 = arith.mulf %371, %375 : vector<8x128xf32>
    %377 = arith.addf %370, %376 : vector<8x128xf32>
    %c104_i32_179 = arith.constant 104 : i32
    %378 = tpu.dynamic_rotate %213 by %c104_i32_179 dim 1 : vector<8x128xf32>, i32 -> vector<8x128xf32>
    %c1_180 = arith.constant 1 : index
    %c24_181 = arith.constant 24 : index
    %c0_182 = arith.constant 0 : index
    %379 = vector.load %arg2[%c1_180, %c24_181, %c0_182] : memref<3x27x128xf32, #tpu.memory_space<vmem>>, vector<1x1x128xf32>
    %380 = vector.shape_cast %379 : vector<1x1x128xf32> to vector<128xf32>
    %381 = vector.shape_cast %380 : vector<128xf32> to vector<1x128xf32>
    %382 = vector.broadcast %381 : vector<1x128xf32> to vector<8x128xf32>
    %383 = arith.mulf %378, %382 : vector<8x128xf32>
    %384 = arith.addf %377, %383 : vector<8x128xf32>
    %c96_i32_183 = arith.constant 96 : i32
    %385 = tpu.dynamic_rotate %213 by %c96_i32_183 dim 1 : vector<8x128xf32>, i32 -> vector<8x128xf32>
    %c1_184 = arith.constant 1 : index
    %c25_185 = arith.constant 25 : index
    %c0_186 = arith.constant 0 : index
    %386 = vector.load %arg2[%c1_184, %c25_185, %c0_186] : memref<3x27x128xf32, #tpu.memory_space<vmem>>, vector<1x1x128xf32>
    %387 = vector.shape_cast %386 : vector<1x1x128xf32> to vector<128xf32>
    %388 = vector.shape_cast %387 : vector<128xf32> to vector<1x128xf32>
    %389 = vector.broadcast %388 : vector<1x128xf32> to vector<8x128xf32>
    %390 = arith.mulf %385, %389 : vector<8x128xf32>
    %391 = arith.addf %384, %390 : vector<8x128xf32>
    %c88_i32_187 = arith.constant 88 : i32
    %392 = tpu.dynamic_rotate %213 by %c88_i32_187 dim 1 : vector<8x128xf32>, i32 -> vector<8x128xf32>
    %c1_188 = arith.constant 1 : index
    %c26_189 = arith.constant 26 : index
    %c0_190 = arith.constant 0 : index
    %393 = vector.load %arg2[%c1_188, %c26_189, %c0_190] : memref<3x27x128xf32, #tpu.memory_space<vmem>>, vector<1x1x128xf32>
    %394 = vector.shape_cast %393 : vector<1x1x128xf32> to vector<128xf32>
    %395 = vector.shape_cast %394 : vector<128xf32> to vector<1x128xf32>
    %396 = vector.broadcast %395 : vector<1x128xf32> to vector<8x128xf32>
    %397 = arith.mulf %392, %396 : vector<8x128xf32>
    %398 = arith.addf %391, %397 : vector<8x128xf32>
    %c1_191 = arith.constant 1 : index
    %c0_192 = arith.constant 0 : index
    %c0_193 = arith.constant 0 : index
    %399 = vector.load %arg3[%c1_191, %c0_192, %c0_193] : memref<3x128x128xf32, #tpu.memory_space<vmem>>, vector<1x128x128xf32>
    %400 = vector.shape_cast %399 : vector<1x128x128xf32> to vector<128x128xf32>
    %cst_194 = arith.constant dense<0.000000e+00> : vector<8x128xf32>
    %401 = tpu.matmul %398, %400, %cst_194 {dimension_numbers = #tpu.dot_dimension_numbers<[1], [0], [0], [1], [0, 0, 1, 1], [], []>} : vector<8x128xf32>, vector<128x128xf32>, vector<8x128xf32> -> vector<8x128xf32>
    %c1_195 = arith.constant 1 : index
    %c0_196 = arith.constant 0 : index
    %402 = vector.load %arg4[%c1_195, %c0_196] : memref<3x128xf32, #tpu.memory_space<vmem>>, vector<1x128xf32>
    %403 = vector.shape_cast %402 : vector<1x128xf32> to vector<128xf32>
    %404 = vector.shape_cast %403 : vector<128xf32> to vector<1x128xf32>
    %405 = vector.broadcast %404 : vector<1x128xf32> to vector<8x128xf32>
    %406 = arith.addf %401, %405 : vector<8x128xf32>
    %cst_197 = arith.constant 0.000000e+00 : f32
    %407 = vector.broadcast %cst_197 : f32 to vector<8x128xf32>
    %408 = arith.maximumf %406, %407 : vector<8x128xf32>
    %c1_i32_198 = arith.constant 1 : i32
    %409 = tpu.dynamic_rotate %408 by %c1_i32_198 dim 0 : vector<8x128xf32>, i32 -> vector<8x128xf32>
    %cst_199 = arith.constant 0.000000e+00 : f32
    %410 = vector.broadcast %cst_199 : f32 to vector<8x128xf32>
    %411 = arith.select %4, %409, %410 : vector<8x128xi1>, vector<8x128xf32>
    %c7_i32_200 = arith.constant 7 : i32
    %412 = tpu.dynamic_rotate %408 by %c7_i32_200 dim 0 : vector<8x128xf32>, i32 -> vector<8x128xf32>
    %cst_201 = arith.constant 0.000000e+00 : f32
    %413 = vector.broadcast %cst_201 : f32 to vector<8x128xf32>
    %414 = arith.select %6, %412, %413 : vector<8x128xi1>, vector<8x128xf32>
    %c40_i32_202 = arith.constant 40 : i32
    %415 = tpu.dynamic_rotate %411 by %c40_i32_202 dim 1 : vector<8x128xf32>, i32 -> vector<8x128xf32>
    %c2_203 = arith.constant 2 : index
    %c0_204 = arith.constant 0 : index
    %c0_205 = arith.constant 0 : index
    %416 = vector.load %arg2[%c2_203, %c0_204, %c0_205] : memref<3x27x128xf32, #tpu.memory_space<vmem>>, vector<1x1x128xf32>
    %417 = vector.shape_cast %416 : vector<1x1x128xf32> to vector<128xf32>
    %418 = vector.shape_cast %417 : vector<128xf32> to vector<1x128xf32>
    %419 = vector.broadcast %418 : vector<1x128xf32> to vector<8x128xf32>
    %420 = arith.mulf %415, %419 : vector<8x128xf32>
    %c32_i32_206 = arith.constant 32 : i32
    %421 = tpu.dynamic_rotate %411 by %c32_i32_206 dim 1 : vector<8x128xf32>, i32 -> vector<8x128xf32>
    %c2_207 = arith.constant 2 : index
    %c1_208 = arith.constant 1 : index
    %c0_209 = arith.constant 0 : index
    %422 = vector.load %arg2[%c2_207, %c1_208, %c0_209] : memref<3x27x128xf32, #tpu.memory_space<vmem>>, vector<1x1x128xf32>
    %423 = vector.shape_cast %422 : vector<1x1x128xf32> to vector<128xf32>
    %424 = vector.shape_cast %423 : vector<128xf32> to vector<1x128xf32>
    %425 = vector.broadcast %424 : vector<1x128xf32> to vector<8x128xf32>
    %426 = arith.mulf %421, %425 : vector<8x128xf32>
    %427 = arith.addf %420, %426 : vector<8x128xf32>
    %c24_i32_210 = arith.constant 24 : i32
    %428 = tpu.dynamic_rotate %411 by %c24_i32_210 dim 1 : vector<8x128xf32>, i32 -> vector<8x128xf32>
    %c2_211 = arith.constant 2 : index
    %c2_212 = arith.constant 2 : index
    %c0_213 = arith.constant 0 : index
    %429 = vector.load %arg2[%c2_211, %c2_212, %c0_213] : memref<3x27x128xf32, #tpu.memory_space<vmem>>, vector<1x1x128xf32>
    %430 = vector.shape_cast %429 : vector<1x1x128xf32> to vector<128xf32>
    %431 = vector.shape_cast %430 : vector<128xf32> to vector<1x128xf32>
    %432 = vector.broadcast %431 : vector<1x128xf32> to vector<8x128xf32>
    %433 = arith.mulf %428, %432 : vector<8x128xf32>
    %434 = arith.addf %427, %433 : vector<8x128xf32>
    %c8_i32_214 = arith.constant 8 : i32
    %435 = tpu.dynamic_rotate %411 by %c8_i32_214 dim 1 : vector<8x128xf32>, i32 -> vector<8x128xf32>
    %c2_215 = arith.constant 2 : index
    %c3_216 = arith.constant 3 : index
    %c0_217 = arith.constant 0 : index
    %436 = vector.load %arg2[%c2_215, %c3_216, %c0_217] : memref<3x27x128xf32, #tpu.memory_space<vmem>>, vector<1x1x128xf32>
    %437 = vector.shape_cast %436 : vector<1x1x128xf32> to vector<128xf32>
    %438 = vector.shape_cast %437 : vector<128xf32> to vector<1x128xf32>
    %439 = vector.broadcast %438 : vector<1x128xf32> to vector<8x128xf32>
    %440 = arith.mulf %435, %439 : vector<8x128xf32>
    %441 = arith.addf %434, %440 : vector<8x128xf32>
    %c2_218 = arith.constant 2 : index
    %c4_219 = arith.constant 4 : index
    %c0_220 = arith.constant 0 : index
    %442 = vector.load %arg2[%c2_218, %c4_219, %c0_220] : memref<3x27x128xf32, #tpu.memory_space<vmem>>, vector<1x1x128xf32>
    %443 = vector.shape_cast %442 : vector<1x1x128xf32> to vector<128xf32>
    %444 = vector.shape_cast %443 : vector<128xf32> to vector<1x128xf32>
    %445 = vector.broadcast %444 : vector<1x128xf32> to vector<8x128xf32>
    %446 = arith.mulf %411, %445 : vector<8x128xf32>
    %447 = arith.addf %441, %446 : vector<8x128xf32>
    %c120_i32_221 = arith.constant 120 : i32
    %448 = tpu.dynamic_rotate %411 by %c120_i32_221 dim 1 : vector<8x128xf32>, i32 -> vector<8x128xf32>
    %c2_222 = arith.constant 2 : index
    %c5_223 = arith.constant 5 : index
    %c0_224 = arith.constant 0 : index
    %449 = vector.load %arg2[%c2_222, %c5_223, %c0_224] : memref<3x27x128xf32, #tpu.memory_space<vmem>>, vector<1x1x128xf32>
    %450 = vector.shape_cast %449 : vector<1x1x128xf32> to vector<128xf32>
    %451 = vector.shape_cast %450 : vector<128xf32> to vector<1x128xf32>
    %452 = vector.broadcast %451 : vector<1x128xf32> to vector<8x128xf32>
    %453 = arith.mulf %448, %452 : vector<8x128xf32>
    %454 = arith.addf %447, %453 : vector<8x128xf32>
    %c104_i32_225 = arith.constant 104 : i32
    %455 = tpu.dynamic_rotate %411 by %c104_i32_225 dim 1 : vector<8x128xf32>, i32 -> vector<8x128xf32>
    %c2_226 = arith.constant 2 : index
    %c6_227 = arith.constant 6 : index
    %c0_228 = arith.constant 0 : index
    %456 = vector.load %arg2[%c2_226, %c6_227, %c0_228] : memref<3x27x128xf32, #tpu.memory_space<vmem>>, vector<1x1x128xf32>
    %457 = vector.shape_cast %456 : vector<1x1x128xf32> to vector<128xf32>
    %458 = vector.shape_cast %457 : vector<128xf32> to vector<1x128xf32>
    %459 = vector.broadcast %458 : vector<1x128xf32> to vector<8x128xf32>
    %460 = arith.mulf %455, %459 : vector<8x128xf32>
    %461 = arith.addf %454, %460 : vector<8x128xf32>
    %c96_i32_229 = arith.constant 96 : i32
    %462 = tpu.dynamic_rotate %411 by %c96_i32_229 dim 1 : vector<8x128xf32>, i32 -> vector<8x128xf32>
    %c2_230 = arith.constant 2 : index
    %c7_231 = arith.constant 7 : index
    %c0_232 = arith.constant 0 : index
    %463 = vector.load %arg2[%c2_230, %c7_231, %c0_232] : memref<3x27x128xf32, #tpu.memory_space<vmem>>, vector<1x1x128xf32>
    %464 = vector.shape_cast %463 : vector<1x1x128xf32> to vector<128xf32>
    %465 = vector.shape_cast %464 : vector<128xf32> to vector<1x128xf32>
    %466 = vector.broadcast %465 : vector<1x128xf32> to vector<8x128xf32>
    %467 = arith.mulf %462, %466 : vector<8x128xf32>
    %468 = arith.addf %461, %467 : vector<8x128xf32>
    %c88_i32_233 = arith.constant 88 : i32
    %469 = tpu.dynamic_rotate %411 by %c88_i32_233 dim 1 : vector<8x128xf32>, i32 -> vector<8x128xf32>
    %c2_234 = arith.constant 2 : index
    %c8_235 = arith.constant 8 : index
    %c0_236 = arith.constant 0 : index
    %470 = vector.load %arg2[%c2_234, %c8_235, %c0_236] : memref<3x27x128xf32, #tpu.memory_space<vmem>>, vector<1x1x128xf32>
    %471 = vector.shape_cast %470 : vector<1x1x128xf32> to vector<128xf32>
    %472 = vector.shape_cast %471 : vector<128xf32> to vector<1x128xf32>
    %473 = vector.broadcast %472 : vector<1x128xf32> to vector<8x128xf32>
    %474 = arith.mulf %469, %473 : vector<8x128xf32>
    %475 = arith.addf %468, %474 : vector<8x128xf32>
    %c40_i32_237 = arith.constant 40 : i32
    %476 = tpu.dynamic_rotate %408 by %c40_i32_237 dim 1 : vector<8x128xf32>, i32 -> vector<8x128xf32>
    %c2_238 = arith.constant 2 : index
    %c9_239 = arith.constant 9 : index
    %c0_240 = arith.constant 0 : index
    %477 = vector.load %arg2[%c2_238, %c9_239, %c0_240] : memref<3x27x128xf32, #tpu.memory_space<vmem>>, vector<1x1x128xf32>
    %478 = vector.shape_cast %477 : vector<1x1x128xf32> to vector<128xf32>
    %479 = vector.shape_cast %478 : vector<128xf32> to vector<1x128xf32>
    %480 = vector.broadcast %479 : vector<1x128xf32> to vector<8x128xf32>
    %481 = arith.mulf %476, %480 : vector<8x128xf32>
    %482 = arith.addf %475, %481 : vector<8x128xf32>
    %c32_i32_241 = arith.constant 32 : i32
    %483 = tpu.dynamic_rotate %408 by %c32_i32_241 dim 1 : vector<8x128xf32>, i32 -> vector<8x128xf32>
    %c2_242 = arith.constant 2 : index
    %c10_243 = arith.constant 10 : index
    %c0_244 = arith.constant 0 : index
    %484 = vector.load %arg2[%c2_242, %c10_243, %c0_244] : memref<3x27x128xf32, #tpu.memory_space<vmem>>, vector<1x1x128xf32>
    %485 = vector.shape_cast %484 : vector<1x1x128xf32> to vector<128xf32>
    %486 = vector.shape_cast %485 : vector<128xf32> to vector<1x128xf32>
    %487 = vector.broadcast %486 : vector<1x128xf32> to vector<8x128xf32>
    %488 = arith.mulf %483, %487 : vector<8x128xf32>
    %489 = arith.addf %482, %488 : vector<8x128xf32>
    %c24_i32_245 = arith.constant 24 : i32
    %490 = tpu.dynamic_rotate %408 by %c24_i32_245 dim 1 : vector<8x128xf32>, i32 -> vector<8x128xf32>
    %c2_246 = arith.constant 2 : index
    %c11_247 = arith.constant 11 : index
    %c0_248 = arith.constant 0 : index
    %491 = vector.load %arg2[%c2_246, %c11_247, %c0_248] : memref<3x27x128xf32, #tpu.memory_space<vmem>>, vector<1x1x128xf32>
    %492 = vector.shape_cast %491 : vector<1x1x128xf32> to vector<128xf32>
    %493 = vector.shape_cast %492 : vector<128xf32> to vector<1x128xf32>
    %494 = vector.broadcast %493 : vector<1x128xf32> to vector<8x128xf32>
    %495 = arith.mulf %490, %494 : vector<8x128xf32>
    %496 = arith.addf %489, %495 : vector<8x128xf32>
    %c8_i32_249 = arith.constant 8 : i32
    %497 = tpu.dynamic_rotate %408 by %c8_i32_249 dim 1 : vector<8x128xf32>, i32 -> vector<8x128xf32>
    %c2_250 = arith.constant 2 : index
    %c12_251 = arith.constant 12 : index
    %c0_252 = arith.constant 0 : index
    %498 = vector.load %arg2[%c2_250, %c12_251, %c0_252] : memref<3x27x128xf32, #tpu.memory_space<vmem>>, vector<1x1x128xf32>
    %499 = vector.shape_cast %498 : vector<1x1x128xf32> to vector<128xf32>
    %500 = vector.shape_cast %499 : vector<128xf32> to vector<1x128xf32>
    %501 = vector.broadcast %500 : vector<1x128xf32> to vector<8x128xf32>
    %502 = arith.mulf %497, %501 : vector<8x128xf32>
    %503 = arith.addf %496, %502 : vector<8x128xf32>
    %c2_253 = arith.constant 2 : index
    %c13_254 = arith.constant 13 : index
    %c0_255 = arith.constant 0 : index
    %504 = vector.load %arg2[%c2_253, %c13_254, %c0_255] : memref<3x27x128xf32, #tpu.memory_space<vmem>>, vector<1x1x128xf32>
    %505 = vector.shape_cast %504 : vector<1x1x128xf32> to vector<128xf32>
    %506 = vector.shape_cast %505 : vector<128xf32> to vector<1x128xf32>
    %507 = vector.broadcast %506 : vector<1x128xf32> to vector<8x128xf32>
    %508 = arith.mulf %408, %507 : vector<8x128xf32>
    %509 = arith.addf %503, %508 : vector<8x128xf32>
    %c120_i32_256 = arith.constant 120 : i32
    %510 = tpu.dynamic_rotate %408 by %c120_i32_256 dim 1 : vector<8x128xf32>, i32 -> vector<8x128xf32>
    %c2_257 = arith.constant 2 : index
    %c14_258 = arith.constant 14 : index
    %c0_259 = arith.constant 0 : index
    %511 = vector.load %arg2[%c2_257, %c14_258, %c0_259] : memref<3x27x128xf32, #tpu.memory_space<vmem>>, vector<1x1x128xf32>
    %512 = vector.shape_cast %511 : vector<1x1x128xf32> to vector<128xf32>
    %513 = vector.shape_cast %512 : vector<128xf32> to vector<1x128xf32>
    %514 = vector.broadcast %513 : vector<1x128xf32> to vector<8x128xf32>
    %515 = arith.mulf %510, %514 : vector<8x128xf32>
    %516 = arith.addf %509, %515 : vector<8x128xf32>
    %c104_i32_260 = arith.constant 104 : i32
    %517 = tpu.dynamic_rotate %408 by %c104_i32_260 dim 1 : vector<8x128xf32>, i32 -> vector<8x128xf32>
    %c2_261 = arith.constant 2 : index
    %c15_262 = arith.constant 15 : index
    %c0_263 = arith.constant 0 : index
    %518 = vector.load %arg2[%c2_261, %c15_262, %c0_263] : memref<3x27x128xf32, #tpu.memory_space<vmem>>, vector<1x1x128xf32>
    %519 = vector.shape_cast %518 : vector<1x1x128xf32> to vector<128xf32>
    %520 = vector.shape_cast %519 : vector<128xf32> to vector<1x128xf32>
    %521 = vector.broadcast %520 : vector<1x128xf32> to vector<8x128xf32>
    %522 = arith.mulf %517, %521 : vector<8x128xf32>
    %523 = arith.addf %516, %522 : vector<8x128xf32>
    %c96_i32_264 = arith.constant 96 : i32
    %524 = tpu.dynamic_rotate %408 by %c96_i32_264 dim 1 : vector<8x128xf32>, i32 -> vector<8x128xf32>
    %c2_265 = arith.constant 2 : index
    %c16_266 = arith.constant 16 : index
    %c0_267 = arith.constant 0 : index
    %525 = vector.load %arg2[%c2_265, %c16_266, %c0_267] : memref<3x27x128xf32, #tpu.memory_space<vmem>>, vector<1x1x128xf32>
    %526 = vector.shape_cast %525 : vector<1x1x128xf32> to vector<128xf32>
    %527 = vector.shape_cast %526 : vector<128xf32> to vector<1x128xf32>
    %528 = vector.broadcast %527 : vector<1x128xf32> to vector<8x128xf32>
    %529 = arith.mulf %524, %528 : vector<8x128xf32>
    %530 = arith.addf %523, %529 : vector<8x128xf32>
    %c88_i32_268 = arith.constant 88 : i32
    %531 = tpu.dynamic_rotate %408 by %c88_i32_268 dim 1 : vector<8x128xf32>, i32 -> vector<8x128xf32>
    %c2_269 = arith.constant 2 : index
    %c17_270 = arith.constant 17 : index
    %c0_271 = arith.constant 0 : index
    %532 = vector.load %arg2[%c2_269, %c17_270, %c0_271] : memref<3x27x128xf32, #tpu.memory_space<vmem>>, vector<1x1x128xf32>
    %533 = vector.shape_cast %532 : vector<1x1x128xf32> to vector<128xf32>
    %534 = vector.shape_cast %533 : vector<128xf32> to vector<1x128xf32>
    %535 = vector.broadcast %534 : vector<1x128xf32> to vector<8x128xf32>
    %536 = arith.mulf %531, %535 : vector<8x128xf32>
    %537 = arith.addf %530, %536 : vector<8x128xf32>
    %c40_i32_272 = arith.constant 40 : i32
    %538 = tpu.dynamic_rotate %414 by %c40_i32_272 dim 1 : vector<8x128xf32>, i32 -> vector<8x128xf32>
    %c2_273 = arith.constant 2 : index
    %c18_274 = arith.constant 18 : index
    %c0_275 = arith.constant 0 : index
    %539 = vector.load %arg2[%c2_273, %c18_274, %c0_275] : memref<3x27x128xf32, #tpu.memory_space<vmem>>, vector<1x1x128xf32>
    %540 = vector.shape_cast %539 : vector<1x1x128xf32> to vector<128xf32>
    %541 = vector.shape_cast %540 : vector<128xf32> to vector<1x128xf32>
    %542 = vector.broadcast %541 : vector<1x128xf32> to vector<8x128xf32>
    %543 = arith.mulf %538, %542 : vector<8x128xf32>
    %544 = arith.addf %537, %543 : vector<8x128xf32>
    %c32_i32_276 = arith.constant 32 : i32
    %545 = tpu.dynamic_rotate %414 by %c32_i32_276 dim 1 : vector<8x128xf32>, i32 -> vector<8x128xf32>
    %c2_277 = arith.constant 2 : index
    %c19_278 = arith.constant 19 : index
    %c0_279 = arith.constant 0 : index
    %546 = vector.load %arg2[%c2_277, %c19_278, %c0_279] : memref<3x27x128xf32, #tpu.memory_space<vmem>>, vector<1x1x128xf32>
    %547 = vector.shape_cast %546 : vector<1x1x128xf32> to vector<128xf32>
    %548 = vector.shape_cast %547 : vector<128xf32> to vector<1x128xf32>
    %549 = vector.broadcast %548 : vector<1x128xf32> to vector<8x128xf32>
    %550 = arith.mulf %545, %549 : vector<8x128xf32>
    %551 = arith.addf %544, %550 : vector<8x128xf32>
    %c24_i32_280 = arith.constant 24 : i32
    %552 = tpu.dynamic_rotate %414 by %c24_i32_280 dim 1 : vector<8x128xf32>, i32 -> vector<8x128xf32>
    %c2_281 = arith.constant 2 : index
    %c20_282 = arith.constant 20 : index
    %c0_283 = arith.constant 0 : index
    %553 = vector.load %arg2[%c2_281, %c20_282, %c0_283] : memref<3x27x128xf32, #tpu.memory_space<vmem>>, vector<1x1x128xf32>
    %554 = vector.shape_cast %553 : vector<1x1x128xf32> to vector<128xf32>
    %555 = vector.shape_cast %554 : vector<128xf32> to vector<1x128xf32>
    %556 = vector.broadcast %555 : vector<1x128xf32> to vector<8x128xf32>
    %557 = arith.mulf %552, %556 : vector<8x128xf32>
    %558 = arith.addf %551, %557 : vector<8x128xf32>
    %c8_i32_284 = arith.constant 8 : i32
    %559 = tpu.dynamic_rotate %414 by %c8_i32_284 dim 1 : vector<8x128xf32>, i32 -> vector<8x128xf32>
    %c2_285 = arith.constant 2 : index
    %c21_286 = arith.constant 21 : index
    %c0_287 = arith.constant 0 : index
    %560 = vector.load %arg2[%c2_285, %c21_286, %c0_287] : memref<3x27x128xf32, #tpu.memory_space<vmem>>, vector<1x1x128xf32>
    %561 = vector.shape_cast %560 : vector<1x1x128xf32> to vector<128xf32>
    %562 = vector.shape_cast %561 : vector<128xf32> to vector<1x128xf32>
    %563 = vector.broadcast %562 : vector<1x128xf32> to vector<8x128xf32>
    %564 = arith.mulf %559, %563 : vector<8x128xf32>
    %565 = arith.addf %558, %564 : vector<8x128xf32>
    %c2_288 = arith.constant 2 : index
    %c22_289 = arith.constant 22 : index
    %c0_290 = arith.constant 0 : index
    %566 = vector.load %arg2[%c2_288, %c22_289, %c0_290] : memref<3x27x128xf32, #tpu.memory_space<vmem>>, vector<1x1x128xf32>
    %567 = vector.shape_cast %566 : vector<1x1x128xf32> to vector<128xf32>
    %568 = vector.shape_cast %567 : vector<128xf32> to vector<1x128xf32>
    %569 = vector.broadcast %568 : vector<1x128xf32> to vector<8x128xf32>
    %570 = arith.mulf %414, %569 : vector<8x128xf32>
    %571 = arith.addf %565, %570 : vector<8x128xf32>
    %c120_i32_291 = arith.constant 120 : i32
    %572 = tpu.dynamic_rotate %414 by %c120_i32_291 dim 1 : vector<8x128xf32>, i32 -> vector<8x128xf32>
    %c2_292 = arith.constant 2 : index
    %c23_293 = arith.constant 23 : index
    %c0_294 = arith.constant 0 : index
    %573 = vector.load %arg2[%c2_292, %c23_293, %c0_294] : memref<3x27x128xf32, #tpu.memory_space<vmem>>, vector<1x1x128xf32>
    %574 = vector.shape_cast %573 : vector<1x1x128xf32> to vector<128xf32>
    %575 = vector.shape_cast %574 : vector<128xf32> to vector<1x128xf32>
    %576 = vector.broadcast %575 : vector<1x128xf32> to vector<8x128xf32>
    %577 = arith.mulf %572, %576 : vector<8x128xf32>
    %578 = arith.addf %571, %577 : vector<8x128xf32>
    %c104_i32_295 = arith.constant 104 : i32
    %579 = tpu.dynamic_rotate %414 by %c104_i32_295 dim 1 : vector<8x128xf32>, i32 -> vector<8x128xf32>
    %c2_296 = arith.constant 2 : index
    %c24_297 = arith.constant 24 : index
    %c0_298 = arith.constant 0 : index
    %580 = vector.load %arg2[%c2_296, %c24_297, %c0_298] : memref<3x27x128xf32, #tpu.memory_space<vmem>>, vector<1x1x128xf32>
    %581 = vector.shape_cast %580 : vector<1x1x128xf32> to vector<128xf32>
    %582 = vector.shape_cast %581 : vector<128xf32> to vector<1x128xf32>
    %583 = vector.broadcast %582 : vector<1x128xf32> to vector<8x128xf32>
    %584 = arith.mulf %579, %583 : vector<8x128xf32>
    %585 = arith.addf %578, %584 : vector<8x128xf32>
    %c96_i32_299 = arith.constant 96 : i32
    %586 = tpu.dynamic_rotate %414 by %c96_i32_299 dim 1 : vector<8x128xf32>, i32 -> vector<8x128xf32>
    %c2_300 = arith.constant 2 : index
    %c25_301 = arith.constant 25 : index
    %c0_302 = arith.constant 0 : index
    %587 = vector.load %arg2[%c2_300, %c25_301, %c0_302] : memref<3x27x128xf32, #tpu.memory_space<vmem>>, vector<1x1x128xf32>
    %588 = vector.shape_cast %587 : vector<1x1x128xf32> to vector<128xf32>
    %589 = vector.shape_cast %588 : vector<128xf32> to vector<1x128xf32>
    %590 = vector.broadcast %589 : vector<1x128xf32> to vector<8x128xf32>
    %591 = arith.mulf %586, %590 : vector<8x128xf32>
    %592 = arith.addf %585, %591 : vector<8x128xf32>
    %c88_i32_303 = arith.constant 88 : i32
    %593 = tpu.dynamic_rotate %414 by %c88_i32_303 dim 1 : vector<8x128xf32>, i32 -> vector<8x128xf32>
    %c2_304 = arith.constant 2 : index
    %c26_305 = arith.constant 26 : index
    %c0_306 = arith.constant 0 : index
    %594 = vector.load %arg2[%c2_304, %c26_305, %c0_306] : memref<3x27x128xf32, #tpu.memory_space<vmem>>, vector<1x1x128xf32>
    %595 = vector.shape_cast %594 : vector<1x1x128xf32> to vector<128xf32>
    %596 = vector.shape_cast %595 : vector<128xf32> to vector<1x128xf32>
    %597 = vector.broadcast %596 : vector<1x128xf32> to vector<8x128xf32>
    %598 = arith.mulf %593, %597 : vector<8x128xf32>
    %599 = arith.addf %592, %598 : vector<8x128xf32>
    %c2_307 = arith.constant 2 : index
    %c0_308 = arith.constant 0 : index
    %c0_309 = arith.constant 0 : index
    %600 = vector.load %arg3[%c2_307, %c0_308, %c0_309] : memref<3x128x128xf32, #tpu.memory_space<vmem>>, vector<1x128x128xf32>
    %601 = vector.shape_cast %600 : vector<1x128x128xf32> to vector<128x128xf32>
    %cst_310 = arith.constant dense<0.000000e+00> : vector<8x128xf32>
    %602 = tpu.matmul %599, %601, %cst_310 {dimension_numbers = #tpu.dot_dimension_numbers<[1], [0], [0], [1], [0, 0, 1, 1], [], []>} : vector<8x128xf32>, vector<128x128xf32>, vector<8x128xf32> -> vector<8x128xf32>
    %c2_311 = arith.constant 2 : index
    %c0_312 = arith.constant 0 : index
    %603 = vector.load %arg4[%c2_311, %c0_312] : memref<3x128xf32, #tpu.memory_space<vmem>>, vector<1x128xf32>
    %604 = vector.shape_cast %603 : vector<1x128xf32> to vector<128xf32>
    %605 = vector.shape_cast %604 : vector<128xf32> to vector<1x128xf32>
    %606 = vector.broadcast %605 : vector<1x128xf32> to vector<8x128xf32>
    %607 = arith.addf %602, %606 : vector<8x128xf32>
    %cst_313 = arith.constant 0.000000e+00 : f32
    %608 = vector.broadcast %cst_313 : f32 to vector<8x128xf32>
    %609 = arith.maximumf %607, %608 : vector<8x128xf32>
    %610 = arith.addf %609, %1 : vector<8x128xf32>
    %cst_314 = arith.constant 0.000000e+00 : f32
    %611 = vector.broadcast %cst_314 : f32 to vector<8x128xf32>
    %612 = arith.maximumf %610, %611 : vector<8x128xf32>
    %c0_315 = arith.constant 0 : index
    %c0_316 = arith.constant 0 : index
    %c0_317 = arith.constant 0 : index
    %613 = vector.load %arg5[%c0_315, %c0_316, %c0_317] : memref<1x8x128xf32, #tpu.memory_space<vmem>>, vector<1x8x128xf32>
    %614 = vector.shape_cast %613 : vector<1x8x128xf32> to vector<8x128xf32>
    %615 = vector.shape_cast %612 : vector<8x128xf32> to vector<1x8x128xf32>
    tpu.vector_store %arg5[%c0_315, %c0_316, %c0_317], %615 {strides = array<i32>} : memref<1x8x128xf32, #tpu.memory_space<vmem>>, vector<1x8x128xf32>,
    return
  }
  func.func @transform_0(%arg0: i32) -> (i32, i32, i32) {
    %c0_i32 = arith.constant 0 : i32
    %c0_i32_0 = arith.constant 0 : i32
    %c0_i32_1 = arith.constant 0 : i32
    return %arg0, %c0_i32, %c0_i32_0 : i32, i32, i32
  }
  func.func @transform_1(%arg0: i32) -> (i32, i32, i32) {
    %c0_i32 = arith.constant 0 : i32
    %c0_i32_0 = arith.constant 0 : i32
    %c0_i32_1 = arith.constant 0 : i32
    %c0_i32_2 = arith.constant 0 : i32
    return %c0_i32, %c0_i32_0, %c0_i32_1 : i32, i32, i32
  }
  func.func @transform_2(%arg0: i32) -> (i32, i32, i32) {
    %c0_i32 = arith.constant 0 : i32
    %c0_i32_0 = arith.constant 0 : i32
    %c0_i32_1 = arith.constant 0 : i32
    %c0_i32_2 = arith.constant 0 : i32
    return %c0_i32, %c0_i32_0, %c0_i32_1 : i32, i32, i32
  }
  func.func @transform_3(%arg0: i32) -> (i32, i32) {
    %c0_i32 = arith.constant 0 : i32
    %c0_i32_0 = arith.constant 0 : i32
    %c0_i32_1 = arith.constant 0 : i32
    return %c0_i32, %c0_i32_0 : i32, i32
  }
  func.func @transform_4(%arg0: i32) -> (i32, i32, i32) {
    %c0_i32 = arith.constant 0 : i32
    %c0_i32_0 = arith.constant 0 : i32
    %c0_i32_1 = arith.constant 0 : i32
    return %arg0, %c0_i32, %c0_i32_0 : i32, i32, i32
  }
}

</mosaic_0001>

<llo_original>
// kernel: tpu_custom_call.1
$region0: #{tpu_custom_call.1}
  #allocation0 [shape = 'u32[]', space=smem, size = 0x4, offset = 0x4, fixed_abs, tag = 'smem constant byte address 0x4 - core index']
  #allocation1 [shape = 'u32[144,128]{1,0:T(1,128)}', space=vmem, size = 0x12000, scoped, tag = 'internal scratch']
  %s0 = inlined_call_operand.hbm [shape: f32[2,8,128], index: 0, kind: input, shape index: {}]
  %s1 = inlined_call_operand.hbm [shape: f32[3,27,128], index: 1, kind: input, shape index: {}]
  %s2 = inlined_call_operand.hbm [shape: f32[3,128,128], index: 2, kind: input, shape index: {}]
  %s3 = inlined_call_operand.vmem [shape: f32[3,128], index: 3, kind: input, shape index: {}]
  %s4 = inlined_call_operand.hbm [shape: f32[2,8,128], index: 4, kind: output, shape index: {}]
  %s5 = sld [smem:[#allocation0]]
  $region61: #{tpu_custom_call.1} parent=0
    _
  %s7 = ssub.s32 1, %s5
  %s8 = scalar_select 0, %s7, %s5
  $region1: #{tpu_custom_call.1} parent=0
    #allocation2 [shape = 'u8[8192]{0}', space=vmem, size = 0x2000, scoped, tag = 'input window, operand 0']
    #allocation3 [shape = 's32[2]{0}', space=sflag, size = 0x8, scoped, tag = 'scoped memory for tpu_custom_call.1']
    #allocation4 [shape = 's32[2]{0}', space=sflag, size = 0x8, scoped, tag = 'scoped memory for tpu_custom_call.1']
    #allocation5 [shape = 'u8[49152]{0}', space=vmem, size = 0xc000, scoped, tag = 'input window, operand 1, single buffered']
    #allocation6 [shape = 's32[1]{0}', space=sflag, size = 0x4, scoped, tag = 'scoped memory for tpu_custom_call.1']
    #allocation7 [shape = 'u8[196608]{0}', space=vmem, size = 0x30000, scoped, tag = 'input window, operand 2, single buffered']
    #allocation8 [shape = 'u8[8192]{0}', space=vmem, size = 0x2000, scoped, tag = 'output window, operand 0']
    %9 = vsyncpa [#allocation3], 0
    %s10 = scalar_lea.sflag [#allocation3], 1
    %11 = vsyncpa %s10, 0
    %12 = vsyncpa [#allocation6], 0
    %13 = vsyncpa [#allocation4], 0
    %s14 = scalar_lea.sflag [#allocation4], 1
    %15 = vsyncpa %s14, 0
    loop: start=0, step=1, limit=4
    $region2: #{tpu_custom_call.1} parent=1 // loop_pre_header
      _
    $region3: #{tpu_custom_call.1} parent=1 // loop_header
      %s17 = sphi 0, %s21
      %p18 = scmp.ge.s32.totalorder %s17, 4
      %s27 = sphi 0, %s29
      %s30 = sphi 0, %s27
      %s31 = sphi 0, %s30
      %s47 = sphi 0, %s31
      %s51 = sphi 0, %s51
      %s53 = sphi 0, %s51
      %s54 = sphi 0, %s53
      %s68 = sphi 0, %s54
      %s72 = sphi 0, %s72
      %s74 = sphi 0, %s72
      %s75 = sphi 0, %s74
      %s89 = sphi 0, %s75
      %s93 = sphi 0, %s93
      %s95 = sphi 0, %s93
      %s96 = sphi 0, %s95
      %s110 = sphi 0, %s96
      %s116 = sphi 0, %s118
      %s119 = sphi 0, %s116
      %s120 = sphi 0, %s119
      %s136 = sphi 0, %s120
    $region4: #{tpu_custom_call.1} parent=1 // loop_header_branch
      %20 = sbr.rel (%p18) target = $region8
    $region5: #{tpu_custom_call.1} parent=1 // loop_body
      %s22 = ssub.s32 %s17, 1
      %s23 = ssub.s32 %s17, 2
      %s24 = sadd.s32 %s17, 1
      %s25 = ssub.s32 %s17, %s24
      %p26 = scmp.eq.s32.totalorder %s25, 0
      %s28 = sadd.s32 %s27, 1
      %s29 = scalar_select %p26, %s27, %s28
      %p32 = pneg %p26
      %p33 = scmp.eq.s32.totalorder %s17, 1
      %p34 = por %p32, %p33
      %p35 = scmp.ne.s32.totalorder %s27, %s30
      %p36 = scmp.eq.s32.totalorder %s17, 0
      %p37 = por %p35, %p36
      %p38 = scmp.ne.s32.totalorder %s27, %s30
      %p39 = scmp.eq.s32.totalorder %s22, 1
      %p40 = por %p38, %p39
      %p41 = scmp.ne.s32.totalorder %s30, %s31
      %p42 = scmp.eq.s32.totalorder %s22, 0
      %p43 = por %p41, %p42
      %p44 = scmp.ne.s32.totalorder %s30, %s31
      %p45 = scmp.eq.s32.totalorder %s23, 1
      %p46 = por %p44, %p45
      %p48 = scmp.ne.s32.totalorder %s31, %s47
      %p49 = scmp.eq.s32.totalorder %s23, 0
      %p50 = por %p48, %p49
      %s52 = sadd.s32 %s51, 1
      %p55 = scmp.eq.s32.totalorder %s17, 1
      %p56 = scmp.ne.s32.totalorder %s51, %s53
      %p57 = scmp.eq.s32.totalorder %s17, 0
      %p58 = por %p56, %p57
      %p59 = scmp.ne.s32.totalorder %s51, %s53
      %p60 = scmp.eq.s32.totalorder %s22, 1
      %p61 = por %p59, %p60
      %p62 = scmp.ne.s32.totalorder %s53, %s54
      %p63 = scmp.eq.s32.totalorder %s22, 0
      %p64 = por %p62, %p63
      %p65 = scmp.ne.s32.totalorder %s53, %s54
      %p66 = scmp.eq.s32.totalorder %s23, 1
      %p67 = por %p65, %p66
      %p69 = scmp.ne.s32.totalorder %s54, %s68
      %p70 = scmp.eq.s32.totalorder %s23, 0
      %p71 = por %p69, %p70
      %s73 = sadd.s32 %s72, 1
      %p76 = scmp.eq.s32.totalorder %s17, 1
      %p77 = scmp.ne.s32.totalorder %s72, %s74
      %p78 = scmp.eq.s32.totalorder %s17, 0
      %p79 = por %p77, %p78
      %p80 = scmp.ne.s32.totalorder %s72, %s74
      %p81 = scmp.eq.s32.totalorder %s22, 1
      %p82 = por %p80, %p81
      %p83 = scmp.ne.s32.totalorder %s74, %s75
      %p84 = scmp.eq.s32.totalorder %s22, 0
      %p85 = por %p83, %p84
      %p86 = scmp.ne.s32.totalorder %s74, %s75
      %p87 = scmp.eq.s32.totalorder %s23, 1
      %p88 = por %p86, %p87
      %p90 = scmp.ne.s32.totalorder %s75, %s89
      %p91 = scmp.eq.s32.totalorder %s23, 0
      %p92 = por %p90, %p91
      %s94 = sadd.s32 %s93, 1
      %p97 = scmp.eq.s32.totalorder %s17, 1
      %p98 = scmp.ne.s32.totalorder %s93, %s95
      %p99 = scmp.eq.s32.totalorder %s17, 0
      %p100 = por %p98, %p99
      %p101 = scmp.ne.s32.totalorder %s93, %s95
      %p102 = scmp.eq.s32.totalorder %s22, 1
      %p103 = por %p101, %p102
      %p104 = scmp.ne.s32.totalorder %s95, %s96
      %p105 = scmp.eq.s32.totalorder %s22, 0
      %p106 = por %p104, %p105
      %p107 = scmp.ne.s32.totalorder %s95, %s96
      %p108 = scmp.eq.s32.totalorder %s23, 1
      %p109 = por %p107, %p108
      %p111 = scmp.ne.s32.totalorder %s96, %s110
      %p112 = scmp.eq.s32.totalorder %s23, 0
      %p113 = por %p111, %p112
      %s114 = ssub.s32 %s17, %s24
      %p115 = scmp.eq.s32.totalorder %s114, 0
      %s117 = sadd.s32 %s116, 1
      %s118 = scalar_select %p115, %s116, %s117
      %p121 = pneg %p115
      %p122 = scmp.eq.s32.totalorder %s17, 1
      %p123 = por %p121, %p122
      %p124 = scmp.ne.s32.totalorder %s116, %s119
      %p125 = scmp.eq.s32.totalorder %s17, 0
      %p126 = por %p124, %p125
      %p127 = scmp.ne.s32.totalorder %s116, %s119
      %p128 = scmp.eq.s32.totalorder %s22, 1
      %p129 = por %p127, %p128
      %p130 = scmp.ne.s32.totalorder %s119, %s120
      %p131 = scmp.eq.s32.totalorder %s22, 0
      %p132 = por %p130, %p131
      %p133 = scmp.ne.s32.totalorder %s119, %s120
      %p134 = scmp.eq.s32.totalorder %s23, 1
      %p135 = por %p133, %p134
      %p137 = scmp.ne.s32.totalorder %s120, %s136
      %p138 = scmp.eq.s32.totalorder %s23, 0
      %p139 = por %p137, %p138
      %p140 = scmp.le.s32.totalorder 1, %s17
      %p141 = scmp.lt.s32.totalorder %s17, 3
      %p142 = pnand %p140, %p141
      %p143 = pneg %p142
      // Predicated region
      $region9: #{tpu_custom_call.1} parent=5 // pred_check
        _
      $region10: #{tpu_custom_call.1} parent=5 // pred_check_branch
        %145 = sbr.rel (%p142) target = $region12
      $region11: #{tpu_custom_call.1} parent=5 // pred_region
        %s146 = ssub.s32 %s17, 1
        // Predicated region
        $region13: #{tpu_custom_call.1} parent=11 // pred_check
          %p147 = pneg %p64
        $region14: #{tpu_custom_call.1} parent=11 // pred_check_branch
          %149 = sbr.rel (%p147) target = $region16
        $region15: #{tpu_custom_call.1} parent=11 // pred_region
          %s151 = ssub.s32 1536, 1536
          %152 = vsyncadd [#allocation6], %s151
          %s153 = sshll.u32 [#allocation5], 4
          %s154 = int_to_ptr.vmem [resolvable:$true] %s153
          %159 = dma.hbm_to_vmem [thread:$0]  %s1, 1536, %s154, [#allocation6], 128, 128, 8
        $region16: #{tpu_custom_call.1} parent=11 // pred_fallthru
          _
        // Predicated region
        $region17: #{tpu_custom_call.1} parent=11 // pred_check
          %p160 = pneg %p85
        $region18: #{tpu_custom_call.1} parent=11 // pred_check_branch
          %162 = sbr.rel (%p160) target = $region20
        $region19: #{tpu_custom_call.1} parent=11 // pred_region
          %s164 = ssub.s32 6144, 6144
          %165 = vsyncadd [#allocation6], %s164
          %s166 = sshll.u32 [#allocation7], 4
          %s167 = int_to_ptr.vmem [resolvable:$true] %s166
          %172 = dma.hbm_to_vmem [thread:$0]  %s2, 6144, %s167, [#allocation6], 128, 128, 8
        $region20: #{tpu_custom_call.1} parent=11 // pred_fallthru
          _
        // Predicated region
        $region21: #{tpu_custom_call.1} parent=11 // pred_check
          %p173 = pneg %p106
        $region22: #{tpu_custom_call.1} parent=11 // pred_check_branch
          %175 = sbr.rel (%p173) target = $region24
        $region23: #{tpu_custom_call.1} parent=11 // pred_region
          _
        $region24: #{tpu_custom_call.1} parent=11 // pred_fallthru
          _
      $region12: #{tpu_custom_call.1} parent=5 // pred_fallthru
        _
      %p176 = scmp.lt.s32.totalorder %s17, 2
      // Predicated region
      $region25: #{tpu_custom_call.1} parent=5 // pred_check
        %p177 = pneg %p176
      $region26: #{tpu_custom_call.1} parent=5 // pred_check_branch
        %179 = sbr.rel (%p177) target = $region28
      $region27: #{tpu_custom_call.1} parent=5 // pred_region
        // Predicated region
        $region29: #{tpu_custom_call.1} parent=27 // pred_check
          %p180 = pneg %p37
        $region30: #{tpu_custom_call.1} parent=27 // pred_check_branch
          %182 = sbr.rel (%p180) target = $region32
        $region31: #{tpu_custom_call.1} parent=27 // pred_region
          %s183 = sand.u32 %s27, 1
          %s184 = scalar_lea.sflag [#allocation3], %s183
          %s185 = sand.u32 %s27, 1
          %s186 = smul.addr %s185, 8
          %s187 = scalar_lea.vmem [#allocation2], %s186
          %s189 = ssub.s32 128, 128
          %190 = vsyncadd %s184, %s189
          %s191 = smul.addr %s17, 128
          %s192 = scalar_lea.hbm %s0, %s191
          %s194 = sshll.u32 %s187, 4
          %s195 = int_to_ptr.vmem [resolvable:$true] %s194
          %197 = dma.hbm_to_vmem [thread:$0]  %s192, 128, %s195, %s184
        $region32: #{tpu_custom_call.1} parent=27 // pred_fallthru
          _
      $region28: #{tpu_custom_call.1} parent=5 // pred_fallthru
        _
      %p198 = scmp.le.s32.totalorder 1, %s17
      %p199 = scmp.lt.s32.totalorder %s17, 3
      %p200 = pnand %p198, %p199
      %p201 = pneg %p200
      // Predicated region
      $region33: #{tpu_custom_call.1} parent=5 // pred_check
        _
      $region34: #{tpu_custom_call.1} parent=5 // pred_check_branch
        %203 = sbr.rel (%p200) target = $region36
      $region35: #{tpu_custom_call.1} parent=5 // pred_region
        %s204 = ssub.s32 %s17, 1
        %s205 = sand.u32 %s30, 1
        %s206 = scalar_lea.sflag [#allocation3], %s205
        %s207 = sand.u32 %s30, 1
        %s208 = smul.addr %s207, 8
        %s209 = scalar_lea.vmem [#allocation2], %s208
        // Predicated region
        $region37: #{tpu_custom_call.1} parent=35 // pred_check
          %p210 = pneg %p43
        $region38: #{tpu_custom_call.1} parent=35 // pred_check_branch
          %212 = sbr.rel (%p210) target = $region40
        $region39: #{tpu_custom_call.1} parent=35 // pred_region
          %213 = dma.done %s206, 128
        $region40: #{tpu_custom_call.1} parent=35 // pred_fallthru
          _
        // Predicated region
        $region41: #{tpu_custom_call.1} parent=35 // pred_check
          %p214 = pneg %p64
        $region42: #{tpu_custom_call.1} parent=35 // pred_check_branch
          %216 = sbr.rel (%p214) target = $region44
        $region43: #{tpu_custom_call.1} parent=35 // pred_region
          %217 = dma.done [#allocation6], 1536
        $region44: #{tpu_custom_call.1} parent=35 // pred_fallthru
          _
        // Predicated region
        $region45: #{tpu_custom_call.1} parent=35 // pred_check
          %p218 = pneg %p85
        $region46: #{tpu_custom_call.1} parent=35 // pred_check_branch
          %220 = sbr.rel (%p218) target = $region48
        $region47: #{tpu_custom_call.1} parent=35 // pred_region
          %221 = dma.done [#allocation6], 6144
        $region48: #{tpu_custom_call.1} parent=35 // pred_fallthru
          _
        %s222 = sand.u32 %s30, 1
        %s223 = scalar_lea.sflag [#allocation3], %s222
        %s224 = sand.u32 %s30, 1
        %s225 = smul.addr %s224, 8
        %s226 = scalar_lea.vmem [#allocation2], %s225
        %p227 = pneg %p43
        %p228 = pneg %p40
        %p229 = pneg %p64
        %p230 = pneg %p61
        %p231 = pneg %p85
        %p232 = pneg %p82
        %p233 = pneg %p106
        %p234 = pneg %p103
        %p235 = pneg %p132
        %p236 = pneg %p129
        %s237 = sand.u32 %s119, 1
        %s238 = scalar_lea.sflag [#allocation4], %s237
        %s239 = sand.u32 %s119, 1
        %s240 = smul.addr %s239, 8
        %s241 = scalar_lea.vmem [#allocation8], %s240
        %v242 = vld [vmem:[%s209] sm:$0xff]
        %v243 = vlaneseq
        %v244 = vshrl.u32 %v243, 7
        %vm245 = vcmp.ge.s32.totalorder %v244, 1
        %vm246 = vcmp.le.s32.totalorder %v244, 6
        %v247 = vrot.slane %v242, 7
        %v248 = vsel %vm245, %v247, 0.0
        %v249 = vrot.slane %v242, 1
        %v250 = vsel %vm246, %v249, 0.0
        %251 = vrot.lane.b32.xlu0 %v248, 40
        %v252 = vpop.permute.xlu0 %251
        %v253 = vld [vmem:[#allocation5] sm:$0x1]
        %v254 = vlaneseq
        %v255 = vshrl.u32 %v254, 7
        %v256 = vsub.s32 0, %v255
        %v257 = vrot.slane %v253, %v256
        %v258 = vmul.f32 %v252, %v257
        %259 = vrot.lane.b32.xlu0 %v248, 32
        %v260 = vpop.permute.xlu0 %259
        %v261 = vld [vmem:[#allocation5 + $0x1] sm:$0x1]
        %v262 = vlaneseq
        %v263 = vshrl.u32 %v262, 7
        %v264 = vsub.s32 0, %v263
        %v265 = vrot.slane %v261, %v264
        %v266 = vmul.f32 %v260, %v265
        %v267 = vadd.f32 %v258, %v266
        %268 = vrot.lane.b32.xlu0 %v248, 24
        %v269 = vpop.permute.xlu0 %268
        %v270 = vld [vmem:[#allocation5 + $0x2] sm:$0x1]
        %v271 = vlaneseq
        %v272 = vshrl.u32 %v271, 7
        %v273 = vsub.s32 0, %v272
        %v274 = vrot.slane %v270, %v273
        %v275 = vmul.f32 %v269, %v274
        %v276 = vadd.f32 %v267, %v275
        %277 = vrot.lane.b32.xlu0 %v248, 8
        %v278 = vpop.permute.xlu0 %277
        %v279 = vld [vmem:[#allocation5 + $0x3] sm:$0x1]
        %v280 = vlaneseq
        %v281 = vshrl.u32 %v280, 7
        %v282 = vsub.s32 0, %v281
        %v283 = vrot.slane %v279, %v282
        %v284 = vmul.f32 %v278, %v283
        %v285 = vadd.f32 %v276, %v284
        %v286 = vld [vmem:[#allocation5 + $0x4] sm:$0x1]
        %v287 = vlaneseq
        %v288 = vshrl.u32 %v287, 7
        %v289 = vsub.s32 0, %v288
        %v290 = vrot.slane %v286, %v289
        %v291 = vmul.f32 %v248, %v290
        %v292 = vadd.f32 %v285, %v291
        %293 = vrot.lane.b32.xlu0 %v248, 120
        %v294 = vpop.permute.xlu0 %293
        %v295 = vld [vmem:[#allocation5 + $0x5] sm:$0x1]
        %v296 = vlaneseq
        %v297 = vshrl.u32 %v296, 7
        %v298 = vsub.s32 0, %v297
        %v299 = vrot.slane %v295, %v298
        %v300 = vmul.f32 %v294, %v299
        %v301 = vadd.f32 %v292, %v300
        %302 = vrot.lane.b32.xlu0 %v248, 104
        %v303 = vpop.permute.xlu0 %302
        %v304 = vld [vmem:[#allocation5 + $0x6] sm:$0x1]
        %v305 = vlaneseq
        %v306 = vshrl.u32 %v305, 7
        %v307 = vsub.s32 0, %v306
        %v308 = vrot.slane %v304, %v307
        %v309 = vmul.f32 %v303, %v308
        %v310 = vadd.f32 %v301, %v309
        %311 = vrot.lane.b32.xlu0 %v248, 96
        %v312 = vpop.permute.xlu0 %311
        %v313 = vld [vmem:[#allocation5 + $0x7] sm:$0x1]
        %v314 = vlaneseq
        %v315 = vshrl.u32 %v314, 7
        %v316 = vsub.s32 0, %v315
        %v317 = vrot.slane %v313, %v316
        %v318 = vmul.f32 %v312, %v317
        %v319 = vadd.f32 %v310, %v318
        %320 = vrot.lane.b32.xlu0 %v248, 88
        %v321 = vpop.permute.xlu0 %320
        %v322 = vld [vmem:[#allocation5 + $0x8] sm:$0x1]
        %v323 = vlaneseq
        %v324 = vshrl.u32 %v323, 7
        %v325 = vsub.s32 0, %v324
        %v326 = vrot.slane %v322, %v325
        %v327 = vmul.f32 %v321, %v326
        %v328 = vadd.f32 %v319, %v327
        %329 = vrot.lane.b32.xlu0 %v242, 40
        %v330 = vpop.permute.xlu0 %329
        %v331 = vld [vmem:[#allocation5 + $0x9] sm:$0x1]
        %v332 = vlaneseq
        %v333 = vshrl.u32 %v332, 7
        %v334 = vsub.s32 0, %v333
        %v335 = vrot.slane %v331, %v334
        %v336 = vmul.f32 %v330, %v335
        %v337 = vadd.f32 %v328, %v336
        %338 = vrot.lane.b32.xlu0 %v242, 32
        %v339 = vpop.permute.xlu0 %338
        %v340 = vld [vmem:[#allocation5 + $0xa] sm:$0x1]
        %v341 = vlaneseq
        %v342 = vshrl.u32 %v341, 7
        %v343 = vsub.s32 0, %v342
        %v344 = vrot.slane %v340, %v343
        %v345 = vmul.f32 %v339, %v344
        %v346 = vadd.f32 %v337, %v345
        %347 = vrot.lane.b32.xlu0 %v242, 24
        %v348 = vpop.permute.xlu0 %347
        %v349 = vld [vmem:[#allocation5 + $0xb] sm:$0x1]
        %v350 = vlaneseq
        %v351 = vshrl.u32 %v350, 7
        %v352 = vsub.s32 0, %v351
        %v353 = vrot.slane %v349, %v352
        %v354 = vmul.f32 %v348, %v353
        %v355 = vadd.f32 %v346, %v354
        %356 = vrot.lane.b32.xlu0 %v242, 8
        %v357 = vpop.permute.xlu0 %356
        %v358 = vld [vmem:[#allocation5 + $0xc] sm:$0x1]
        %v359 = vlaneseq
        %v360 = vshrl.u32 %v359, 7
        %v361 = vsub.s32 0, %v360
        %v362 = vrot.slane %v358, %v361
        %v363 = vmul.f32 %v357, %v362
        %v364 = vadd.f32 %v355, %v363
        %v365 = vld [vmem:[#allocation5 + $0xd] sm:$0x1]
        %v366 = vlaneseq
        %v367 = vshrl.u32 %v366, 7
        %v368 = vsub.s32 0, %v367
        %v369 = vrot.slane %v365, %v368
        %v370 = vmul.f32 %v242, %v369
        %v371 = vadd.f32 %v364, %v370
        %372 = vrot.lane.b32.xlu0 %v242, 120
        %v373 = vpop.permute.xlu0 %372
        %v374 = vld [vmem:[#allocation5 + $0xe] sm:$0x1]
        %v375 = vlaneseq
        %v376 = vshrl.u32 %v375, 7
        %v377 = vsub.s32 0, %v376
        %v378 = vrot.slane %v374, %v377
        %v379 = vmul.f32 %v373, %v378
        %v380 = vadd.f32 %v371, %v379
        %381 = vrot.lane.b32.xlu0 %v242, 104
        %v382 = vpop.permute.xlu0 %381
        %v383 = vld [vmem:[#allocation5 + $0xf] sm:$0x1]
        %v384 = vlaneseq
        %v385 = vshrl.u32 %v384, 7
        %v386 = vsub.s32 0, %v385
        %v387 = vrot.slane %v383, %v386
        %v388 = vmul.f32 %v382, %v387
        %v389 = vadd.f32 %v380, %v388
        %390 = vrot.lane.b32.xlu0 %v242, 96
        %v391 = vpop.permute.xlu0 %390
        %v392 = vld [vmem:[#allocation5 + $0x10] sm:$0x1]
        %v393 = vlaneseq
        %v394 = vshrl.u32 %v393, 7
        %v395 = vsub.s32 0, %v394
        %v396 = vrot.slane %v392, %v395
        %v397 = vmul.f32 %v391, %v396
        %v398 = vadd.f32 %v389, %v397
        %399 = vrot.lane.b32.xlu0 %v242, 88
        %v400 = vpop.permute.xlu0 %399
        %v401 = vld [vmem:[#allocation5 + $0x11] sm:$0x1]
        %v402 = vlaneseq
        %v403 = vshrl.u32 %v402, 7
        %v404 = vsub.s32 0, %v403
        %v405 = vrot.slane %v401, %v404
        %v406 = vmul.f32 %v400, %v405
        %v407 = vadd.f32 %v398, %v406
        %408 = vrot.lane.b32.xlu0 %v250, 40
        %v409 = vpop.permute.xlu0 %408
        %v410 = vld [vmem:[#allocation5 + $0x12] sm:$0x1]
        %v411 = vlaneseq
        %v412 = vshrl.u32 %v411, 7
        %v413 = vsub.s32 0, %v412
        %v414 = vrot.slane %v410, %v413
        %v415 = vmul.f32 %v409, %v414
        %v416 = vadd.f32 %v407, %v415
        %417 = vrot.lane.b32.xlu0 %v250, 32
        %v418 = vpop.permute.xlu0 %417
        %v419 = vld [vmem:[#allocation5 + $0x13] sm:$0x1]
        %v420 = vlaneseq
        %v421 = vshrl.u32 %v420, 7
        %v422 = vsub.s32 0, %v421
        %v423 = vrot.slane %v419, %v422
        %v424 = vmul.f32 %v418, %v423
        %v425 = vadd.f32 %v416, %v424
        %426 = vrot.lane.b32.xlu0 %v250, 24
        %v427 = vpop.permute.xlu0 %426
        %v428 = vld [vmem:[#allocation5 + $0x14] sm:$0x1]
        %v429 = vlaneseq
        %v430 = vshrl.u32 %v429, 7
        %v431 = vsub.s32 0, %v430
        %v432 = vrot.slane %v428, %v431
        %v433 = vmul.f32 %v427, %v432
        %v434 = vadd.f32 %v425, %v433
        %435 = vrot.lane.b32.xlu0 %v250, 8
        %v436 = vpop.permute.xlu0 %435
        %v437 = vld [vmem:[#allocation5 + $0x15] sm:$0x1]
        %v438 = vlaneseq
        %v439 = vshrl.u32 %v438, 7
        %v440 = vsub.s32 0, %v439
        %v441 = vrot.slane %v437, %v440
        %v442 = vmul.f32 %v436, %v441
        %v443 = vadd.f32 %v434, %v442
        %v444 = vld [vmem:[#allocation5 + $0x16] sm:$0x1]
        %v445 = vlaneseq
        %v446 = vshrl.u32 %v445, 7
        %v447 = vsub.s32 0, %v446
        %v448 = vrot.slane %v444, %v447
        %v449 = vmul.f32 %v250, %v448
        %v450 = vadd.f32 %v443, %v449
        %451 = vrot.lane.b32.xlu0 %v250, 120
        %v452 = vpop.permute.xlu0 %451
        %v453 = vld [vmem:[#allocation5 + $0x17] sm:$0x1]
        %v454 = vlaneseq
        %v455 = vshrl.u32 %v454, 7
        %v456 = vsub.s32 0, %v455
        %v457 = vrot.slane %v453, %v456
        %v458 = vmul.f32 %v452, %v457
        %v459 = vadd.f32 %v450, %v458
        %460 = vrot.lane.b32.xlu0 %v250, 104
        %v461 = vpop.permute.xlu0 %460
        %v462 = vld [vmem:[#allocation5 + $0x18] sm:$0x1]
        %v463 = vlaneseq
        %v464 = vshrl.u32 %v463, 7
        %v465 = vsub.s32 0, %v464
        %v466 = vrot.slane %v462, %v465
        %v467 = vmul.f32 %v461, %v466
        %v468 = vadd.f32 %v459, %v467
        %469 = vrot.lane.b32.xlu0 %v250, 96
        %v470 = vpop.permute.xlu0 %469
        %v471 = vld [vmem:[#allocation5 + $0x19] sm:$0x1]
        %v472 = vlaneseq
        %v473 = vshrl.u32 %v472, 7
        %v474 = vsub.s32 0, %v473
        %v475 = vrot.slane %v471, %v474
        %v476 = vmul.f32 %v470, %v475
        %v477 = vadd.f32 %v468, %v476
        %478 = vrot.lane.b32.xlu0 %v250, 88
        %v479 = vpop.permute.xlu0 %478
        %v480 = vld [vmem:[#allocation5 + $0x1a] sm:$0x1]
        %v481 = vlaneseq
        %v482 = vshrl.u32 %v481, 7
        %v483 = vsub.s32 0, %v482
        %v484 = vrot.slane %v480, %v483
        %v485 = vmul.f32 %v479, %v484
        %v486 = vadd.f32 %v477, %v485
        %v487 = vld [vmem:[#allocation7] sm:$0xff]
        %v488 = vld [vmem:[#allocation7 + $0x8] sm:$0xff]
        %v489 = vld [vmem:[#allocation7 + $0x10] sm:$0xff]
        %v490 = vld [vmem:[#allocation7 + $0x18] sm:$0xff]
        %v491 = vld [vmem:[#allocation7 + $0x20] sm:$0xff]
        %v492 = vld [vmem:[#allocation7 + $0x28] sm:$0xff]
        %v493 = vld [vmem:[#allocation7 + $0x30] sm:$0xff]
        %v494 = vld [vmem:[#allocation7 + $0x38] sm:$0xff]
        %v495 = vld [vmem:[#allocation7 + $0x40] sm:$0xff]
        %v496 = vld [vmem:[#allocation7 + $0x48] sm:$0xff]
        %v497 = vld [vmem:[#allocation7 + $0x50] sm:$0xff]
        %v498 = vld [vmem:[#allocation7 + $0x58] sm:$0xff]
        %v499 = vld [vmem:[#allocation7 + $0x60] sm:$0xff]
        %v500 = vld [vmem:[#allocation7 + $0x68] sm:$0xff]
        %v501 = vld [vmem:[#allocation7 + $0x70] sm:$0xff]
        %v502 = vld [vmem:[#allocation7 + $0x78] sm:$0xff]
        %v503 = vld [vmem:[%s3] sm:$0x1]
        %v504 = vlaneseq
        %v505 = vshrl.u32 %v504, 7
        %v506 = vsub.s32 0, %v505
        %v507 = vrot.slane %v503, %v506
        %508 = vmatprep.subr.mxu0 0.0
        %509 = vmatpush1.msra.mxu0 %v487
        %510 = vmatprep.subr.mxu0 0.0
        %511 = vmatpush1.msra.mxu0 %v488
        %512 = vmatprep.subr.mxu0 0.0
        %513 = vmatpush1.msra.mxu0 %v489
        %514 = vmatprep.subr.mxu0 0.0
        %515 = vmatpush1.msra.mxu0 %v490
        %516 = vmatprep.subr.mxu0 0.0
        %517 = vmatpush1.msra.mxu0 %v491
        %518 = vmatprep.subr.mxu0 0.0
        %519 = vmatpush1.msra.mxu0 %v492
        %520 = vmatprep.subr.mxu0 0.0
        %521 = vmatpush1.msra.mxu0 %v493
        %522 = vmatprep.subr.mxu0 0.0
        %523 = vmatpush1.msra.mxu0 %v494
        %524 = vmatprep.subr.mxu0 0.0
        %525 = vmatpush1.msra.mxu0 %v495
        %526 = vmatprep.subr.mxu0 0.0
        %527 = vmatpush1.msra.mxu0 %v496
        %528 = vmatprep.subr.mxu0 0.0
        %529 = vmatpush1.msra.mxu0 %v497
        %530 = vmatprep.subr.mxu0 0.0
        %531 = vmatpush1.msra.mxu0 %v498
        %532 = vmatprep.subr.mxu0 0.0
        %533 = vmatpush1.msra.mxu0 %v499
        %534 = vmatprep.subr.mxu0 0.0
        %535 = vmatpush1.msra.mxu0 %v500
        %536 = vmatprep.subr.mxu0 0.0
        %537 = vmatpush1.msra.mxu0 %v501
        %538 = vmatprep.subr.mxu0 0.0
        %539 = vmatpush1.msra.mxu0 %v502
        %540 = vmatprep.subr.mxu0 0.0
        %541 = vmatpush1.msra.mxu0 0.0
        %542 = vmatprep.subr.mxu0 0.0
        %543 = vmatpush1.msra.mxu0 0.0
        %544 = vmatprep.subr.mxu0 0.0
        %545 = vmatpush1.msra.mxu0 0.0
        %546 = vmatprep.subr.mxu0 0.0
        %547 = vmatpush1.msra.mxu0 0.0
        %548 = vmatprep.subr.mxu0 0.0
        %549 = vmatpush1.msra.mxu0 0.0
        %550 = vmatprep.subr.mxu0 0.0
        %551 = vmatpush1.msra.mxu0 0.0
        %552 = vmatprep.subr.mxu0 0.0
        %553 = vmatpush1.msra.mxu0 0.0
        %554 = vmatprep.subr.mxu0 0.0
        %555 = vmatpush1.msra.mxu0 0.0
        %556 = vmatprep.subr.mxu0 0.0
        %557 = vmatpush1.msra.mxu0 0.0
        %558 = vmatprep.subr.mxu0 0.0
        %559 = vmatpush1.msra.mxu0 0.0
        %560 = vmatprep.subr.mxu0 0.0
        %561 = vmatpush1.msra.mxu0 0.0
        %562 = vmatprep.subr.mxu0 0.0
        %563 = vmatpush1.msra.mxu0 0.0
        %564 = vmatprep.subr.mxu0 0.0
        %565 = vmatpush1.msra.mxu0 0.0
        %566 = vmatprep.subr.mxu0 0.0
        %567 = vmatpush1.msra.mxu0 0.0
        %568 = vmatprep.subr.mxu0 0.0
        %569 = vmatpush1.msra.mxu0 0.0
        %570 = vmatprep.subr.mxu0 0.0
        %571 = vmatpush1.msra.mxu0 0.0
        %572 = vmatprep.mubr.f32.mxu0 0.0
        %573 = vmatmul.mubr.f32.gmra.mrb[0].mxu0 %v486
        %v574 = vpop.f32.mrb[0].mxu0
        %v575 = vadd.f32 %v507, %v574
        %v576 = vpop.f32.mrb[0].mxu0
        %577 = vdwg.mxu0
        %v578 = vmax.f32 %v575, 0.0
        %v579 = vrot.slane %v578, 7
        %v580 = vsel %vm245, %v579, 0.0
        %v581 = vrot.slane %v578, 1
        %v582 = vsel %vm246, %v581, 0.0
        %583 = vrot.lane.b32.xlu0 %v580, 40
        %v584 = vpop.permute.xlu0 %583
        %s585 = scalar_lea.vmem [#allocation5], 32
        %v586 = vld [vmem:[%s585] sm:$0x1]
        %v587 = vlaneseq
        %v588 = vshrl.u32 %v587, 7
        %v589 = vsub.s32 0, %v588
        %v590 = vrot.slane %v586, %v589
        %v591 = vmul.f32 %v584, %v590
        %592 = vrot.lane.b32.xlu0 %v580, 32
        %v593 = vpop.permute.xlu0 %592
        %v594 = vld [vmem:[%s585 + $0x1] sm:$0x1]
        %v595 = vlaneseq
        %v596 = vshrl.u32 %v595, 7
        %v597 = vsub.s32 0, %v596
        %v598 = vrot.slane %v594, %v597
        %v599 = vmul.f32 %v593, %v598
        %v600 = vadd.f32 %v591, %v599
        %601 = vrot.lane.b32.xlu0 %v580, 24
        %v602 = vpop.permute.xlu0 %601
        %v603 = vld [vmem:[%s585 + $0x2] sm:$0x1]
        %v604 = vlaneseq
        %v605 = vshrl.u32 %v604, 7
        %v606 = vsub.s32 0, %v605
        %v607 = vrot.slane %v603, %v606
        %v608 = vmul.f32 %v602, %v607
        %v609 = vadd.f32 %v600, %v608
        %610 = vrot.lane.b32.xlu0 %v580, 8
        %v611 = vpop.permute.xlu0 %610
        %v612 = vld [vmem:[%s585 + $0x3] sm:$0x1]
        %v613 = vlaneseq
        %v614 = vshrl.u32 %v613, 7
        %v615 = vsub.s32 0, %v614
        %v616 = vrot.slane %v612, %v615
        %v617 = vmul.f32 %v611, %v616
        %v618 = vadd.f32 %v609, %v617
        %v619 = vld [vmem:[%s585 + $0x4] sm:$0x1]
        %v620 = vlaneseq
        %v621 = vshrl.u32 %v620, 7
        %v622 = vsub.s32 0, %v621
        %v623 = vrot.slane %v619, %v622
        %v624 = vmul.f32 %v580, %v623
        %v625 = vadd.f32 %v618, %v624
        %626 = vrot.lane.b32.xlu0 %v580, 120
        %v627 = vpop.permute.xlu0 %626
        %v628 = vld [vmem:[%s585 + $0x5] sm:$0x1]
        %v629 = vlaneseq
        %v630 = vshrl.u32 %v629, 7
        %v631 = vsub.s32 0, %v630
        %v632 = vrot.slane %v628, %v631
        %v633 = vmul.f32 %v627, %v632
        %v634 = vadd.f32 %v625, %v633
        %635 = vrot.lane.b32.xlu0 %v580, 104
        %v636 = vpop.permute.xlu0 %635
        %v637 = vld [vmem:[%s585 + $0x6] sm:$0x1]
        %v638 = vlaneseq
        %v639 = vshrl.u32 %v638, 7
        %v640 = vsub.s32 0, %v639
        %v641 = vrot.slane %v637, %v640
        %v642 = vmul.f32 %v636, %v641
        %v643 = vadd.f32 %v634, %v642
        %644 = vrot.lane.b32.xlu0 %v580, 96
        %v645 = vpop.permute.xlu0 %644
        %v646 = vld [vmem:[%s585 + $0x7] sm:$0x1]
        %v647 = vlaneseq
        %v648 = vshrl.u32 %v647, 7
        %v649 = vsub.s32 0, %v648
        %v650 = vrot.slane %v646, %v649
        %v651 = vmul.f32 %v645, %v650
        %v652 = vadd.f32 %v643, %v651
        %653 = vrot.lane.b32.xlu0 %v580, 88
        %v654 = vpop.permute.xlu0 %653
        %v655 = vld [vmem:[%s585 + $0x8] sm:$0x1]
        %v656 = vlaneseq
        %v657 = vshrl.u32 %v656, 7
        %v658 = vsub.s32 0, %v657
        %v659 = vrot.slane %v655, %v658
        %v660 = vmul.f32 %v654, %v659
        %v661 = vadd.f32 %v652, %v660
        %662 = vrot.lane.b32.xlu0 %v578, 40
        %v663 = vpop.permute.xlu0 %662
        %v664 = vld [vmem:[%s585 + $0x9] sm:$0x1]
        %v665 = vlaneseq
        %v666 = vshrl.u32 %v665, 7
        %v667 = vsub.s32 0, %v666
        %v668 = vrot.slane %v664, %v667
        %v669 = vmul.f32 %v663, %v668
        %v670 = vadd.f32 %v661, %v669
        %671 = vrot.lane.b32.xlu0 %v578, 32
        %v672 = vpop.permute.xlu0 %671
        %v673 = vld [vmem:[%s585 + $0xa] sm:$0x1]
        %v674 = vlaneseq
        %v675 = vshrl.u32 %v674, 7
        %v676 = vsub.s32 0, %v675
        %v677 = vrot.slane %v673, %v676
        %v678 = vmul.f32 %v672, %v677
        %v679 = vadd.f32 %v670, %v678
        %680 = vrot.lane.b32.xlu0 %v578, 24
        %v681 = vpop.permute.xlu0 %680
        %v682 = vld [vmem:[%s585 + $0xb] sm:$0x1]
        %v683 = vlaneseq
        %v684 = vshrl.u32 %v683, 7
        %v685 = vsub.s32 0, %v684
        %v686 = vrot.slane %v682, %v685
        %v687 = vmul.f32 %v681, %v686
        %v688 = vadd.f32 %v679, %v687
        %689 = vrot.lane.b32.xlu0 %v578, 8
        %v690 = vpop.permute.xlu0 %689
        %v691 = vld [vmem:[%s585 + $0xc] sm:$0x1]
        %v692 = vlaneseq
        %v693 = vshrl.u32 %v692, 7
        %v694 = vsub.s32 0, %v693
        %v695 = vrot.slane %v691, %v694
        %v696 = vmul.f32 %v690, %v695
        %v697 = vadd.f32 %v688, %v696
        %v698 = vld [vmem:[%s585 + $0xd] sm:$0x1]
        %v699 = vlaneseq
        %v700 = vshrl.u32 %v699, 7
        %v701 = vsub.s32 0, %v700
        %v702 = vrot.slane %v698, %v701
        %v703 = vmul.f32 %v578, %v702
        %v704 = vadd.f32 %v697, %v703
        %705 = vrot.lane.b32.xlu0 %v578, 120
        %v706 = vpop.permute.xlu0 %705
        %v707 = vld [vmem:[%s585 + $0xe] sm:$0x1]
        %v708 = vlaneseq
        %v709 = vshrl.u32 %v708, 7
        %v710 = vsub.s32 0, %v709
        %v711 = vrot.slane %v707, %v710
        %v712 = vmul.f32 %v706, %v711
        %v713 = vadd.f32 %v704, %v712
        %714 = vrot.lane.b32.xlu0 %v578, 104
        %v715 = vpop.permute.xlu0 %714
        %v716 = vld [vmem:[%s585 + $0xf] sm:$0x1]
        %v717 = vlaneseq
        %v718 = vshrl.u32 %v717, 7
        %v719 = vsub.s32 0, %v718
        %v720 = vrot.slane %v716, %v719
        %v721 = vmul.f32 %v715, %v720
        %v722 = vadd.f32 %v713, %v721
        %723 = vrot.lane.b32.xlu0 %v578, 96
        %v724 = vpop.permute.xlu0 %723
        %v725 = vld [vmem:[%s585 + $0x10] sm:$0x1]
        %v726 = vlaneseq
        %v727 = vshrl.u32 %v726, 7
        %v728 = vsub.s32 0, %v727
        %v729 = vrot.slane %v725, %v728
        %v730 = vmul.f32 %v724, %v729
        %v731 = vadd.f32 %v722, %v730
        %732 = vrot.lane.b32.xlu0 %v578, 88
        %v733 = vpop.permute.xlu0 %732
        %v734 = vld [vmem:[%s585 + $0x11] sm:$0x1]
        %v735 = vlaneseq
        %v736 = vshrl.u32 %v735, 7
        %v737 = vsub.s32 0, %v736
        %v738 = vrot.slane %v734, %v737
        %v739 = vmul.f32 %v733, %v738
        %v740 = vadd.f32 %v731, %v739
        %741 = vrot.lane.b32.xlu0 %v582, 40
        %v742 = vpop.permute.xlu0 %741
        %v743 = vld [vmem:[%s585 + $0x12] sm:$0x1]
        %v744 = vlaneseq
        %v745 = vshrl.u32 %v744, 7
        %v746 = vsub.s32 0, %v745
        %v747 = vrot.slane %v743, %v746
        %v748 = vmul.f32 %v742, %v747
        %v749 = vadd.f32 %v740, %v748
        %750 = vrot.lane.b32.xlu0 %v582, 32
        %v751 = vpop.permute.xlu0 %750
        %v752 = vld [vmem:[%s585 + $0x13] sm:$0x1]
        %v753 = vlaneseq
        %v754 = vshrl.u32 %v753, 7
        %v755 = vsub.s32 0, %v754
        %v756 = vrot.slane %v752, %v755
        %v757 = vmul.f32 %v751, %v756
        %v758 = vadd.f32 %v749, %v757
        %759 = vrot.lane.b32.xlu0 %v582, 24
        %v760 = vpop.permute.xlu0 %759
        %v761 = vld [vmem:[%s585 + $0x14] sm:$0x1]
        %v762 = vlaneseq
        %v763 = vshrl.u32 %v762, 7
        %v764 = vsub.s32 0, %v763
        %v765 = vrot.slane %v761, %v764
        %v766 = vmul.f32 %v760, %v765
        %v767 = vadd.f32 %v758, %v766
        %768 = vrot.lane.b32.xlu0 %v582, 8
        %v769 = vpop.permute.xlu0 %768
        %v770 = vld [vmem:[%s585 + $0x15] sm:$0x1]
        %v771 = vlaneseq
        %v772 = vshrl.u32 %v771, 7
        %v773 = vsub.s32 0, %v772
        %v774 = vrot.slane %v770, %v773
        %v775 = vmul.f32 %v769, %v774
        %v776 = vadd.f32 %v767, %v775
        %v777 = vld [vmem:[%s585 + $0x16] sm:$0x1]
        %v778 = vlaneseq
        %v779 = vshrl.u32 %v778, 7
        %v780 = vsub.s32 0, %v779
        %v781 = vrot.slane %v777, %v780
        %v782 = vmul.f32 %v582, %v781
        %v783 = vadd.f32 %v776, %v782
        %784 = vrot.lane.b32.xlu0 %v582, 120
        %v785 = vpop.permute.xlu0 %784
        %v786 = vld [vmem:[%s585 + $0x17] sm:$0x1]
        %v787 = vlaneseq
        %v788 = vshrl.u32 %v787, 7
        %v789 = vsub.s32 0, %v788
        %v790 = vrot.slane %v786, %v789
        %v791 = vmul.f32 %v785, %v790
        %v792 = vadd.f32 %v783, %v791
        %793 = vrot.lane.b32.xlu0 %v582, 104
        %v794 = vpop.permute.xlu0 %793
        %v795 = vld [vmem:[%s585 + $0x18] sm:$0x1]
        %v796 = vlaneseq
        %v797 = vshrl.u32 %v796, 7
        %v798 = vsub.s32 0, %v797
        %v799 = vrot.slane %v795, %v798
        %v800 = vmul.f32 %v794, %v799
        %v801 = vadd.f32 %v792, %v800
        %802 = vrot.lane.b32.xlu0 %v582, 96
        %v803 = vpop.permute.xlu0 %802
        %v804 = vld [vmem:[%s585 + $0x19] sm:$0x1]
        %v805 = vlaneseq
        %v806 = vshrl.u32 %v805, 7
        %v807 = vsub.s32 0, %v806
        %v808 = vrot.slane %v804, %v807
        %v809 = vmul.f32 %v803, %v808
        %v810 = vadd.f32 %v801, %v809
        %811 = vrot.lane.b32.xlu0 %v582, 88
        %v812 = vpop.permute.xlu0 %811
        %v813 = vld [vmem:[%s585 + $0x1a] sm:$0x1]
        %v814 = vlaneseq
        %v815 = vshrl.u32 %v814, 7
        %v816 = vsub.s32 0, %v815
        %v817 = vrot.slane %v813, %v816
        %v818 = vmul.f32 %v812, %v817
        %v819 = vadd.f32 %v810, %v818
        %s820 = scalar_lea.vmem [#allocation7], 128
        %v821 = vld [vmem:[%s820] sm:$0xff]
        %v822 = vld [vmem:[%s820 + $0x8] sm:$0xff]
        %v823 = vld [vmem:[%s820 + $0x10] sm:$0xff]
        %v824 = vld [vmem:[%s820 + $0x18] sm:$0xff]
        %v825 = vld [vmem:[%s820 + $0x20] sm:$0xff]
        %v826 = vld [vmem:[%s820 + $0x28] sm:$0xff]
        %v827 = vld [vmem:[%s820 + $0x30] sm:$0xff]
        %v828 = vld [vmem:[%s820 + $0x38] sm:$0xff]
        %v829 = vld [vmem:[%s820 + $0x40] sm:$0xff]
        %v830 = vld [vmem:[%s820 + $0x48] sm:$0xff]
        %v831 = vld [vmem:[%s820 + $0x50] sm:$0xff]
        %v832 = vld [vmem:[%s820 + $0x58] sm:$0xff]
        %v833 = vld [vmem:[%s820 + $0x60] sm:$0xff]
        %v834 = vld [vmem:[%s820 + $0x68] sm:$0xff]
        %v835 = vld [vmem:[%s820 + $0x70] sm:$0xff]
        %v836 = vld [vmem:[%s820 + $0x78] sm:$0xff]
        %v837 = vld [vmem:[%s3 + $0x1] sm:$0x1]
        %v838 = vlaneseq
        %v839 = vshrl.u32 %v838, 7
        %v840 = vsub.s32 0, %v839
        %v841 = vrot.slane %v837, %v840
        %842 = vmatprep.subr.mxu0 0.0
        %843 = vmatpush1.msra.mxu0 %v821
        %844 = vmatprep.subr.mxu0 0.0
        %845 = vmatpush1.msra.mxu0 %v822
        %846 = vmatprep.subr.mxu0 0.0
        %847 = vmatpush1.msra.mxu0 %v823
        %848 = vmatprep.subr.mxu0 0.0
        %849 = vmatpush1.msra.mxu0 %v824
        %850 = vmatprep.subr.mxu0 0.0
        %851 = vmatpush1.msra.mxu0 %v825
        %852 = vmatprep.subr.mxu0 0.0
        %853 = vmatpush1.msra.mxu0 %v826
        %854 = vmatprep.subr.mxu0 0.0
        %855 = vmatpush1.msra.mxu0 %v827
        %856 = vmatprep.subr.mxu0 0.0
        %857 = vmatpush1.msra.mxu0 %v828
        %858 = vmatprep.subr.mxu0 0.0
        %859 = vmatpush1.msra.mxu0 %v829
        %860 = vmatprep.subr.mxu0 0.0
        %861 = vmatpush1.msra.mxu0 %v830
        %862 = vmatprep.subr.mxu0 0.0
        %863 = vmatpush1.msra.mxu0 %v831
        %864 = vmatprep.subr.mxu0 0.0
        %865 = vmatpush1.msra.mxu0 %v832
        %866 = vmatprep.subr.mxu0 0.0
        %867 = vmatpush1.msra.mxu0 %v833
        %868 = vmatprep.subr.mxu0 0.0
        %869 = vmatpush1.msra.mxu0 %v834
        %870 = vmatprep.subr.mxu0 0.0
        %871 = vmatpush1.msra.mxu0 %v835
        %872 = vmatprep.subr.mxu0 0.0
        %873 = vmatpush1.msra.mxu0 %v836
        %874 = vmatprep.subr.mxu0 0.0
        %875 = vmatpush1.msra.mxu0 0.0
        %876 = vmatprep.subr.mxu0 0.0
        %877 = vmatpush1.msra.mxu0 0.0
        %878 = vmatprep.subr.mxu0 0.0
        %879 = vmatpush1.msra.mxu0 0.0
        %880 = vmatprep.subr.mxu0 0.0
        %881 = vmatpush1.msra.mxu0 0.0
        %882 = vmatprep.subr.mxu0 0.0
        %883 = vmatpush1.msra.mxu0 0.0
        %884 = vmatprep.subr.mxu0 0.0
        %885 = vmatpush1.msra.mxu0 0.0
        %886 = vmatprep.subr.mxu0 0.0
        %887 = vmatpush1.msra.mxu0 0.0
        %888 = vmatprep.subr.mxu0 0.0
        %889 = vmatpush1.msra.mxu0 0.0
        %890 = vmatprep.subr.mxu0 0.0
        %891 = vmatpush1.msra.mxu0 0.0
        %892 = vmatprep.subr.mxu0 0.0
        %893 = vmatpush1.msra.mxu0 0.0
        %894 = vmatprep.subr.mxu0 0.0
        %895 = vmatpush1.msra.mxu0 0.0
        %896 = vmatprep.subr.mxu0 0.0
        %897 = vmatpush1.msra.mxu0 0.0
        %898 = vmatprep.subr.mxu0 0.0
        %899 = vmatpush1.msra.mxu0 0.0
        %900 = vmatprep.subr.mxu0 0.0
        %901 = vmatpush1.msra.mxu0 0.0
        %902 = vmatprep.subr.mxu0 0.0
        %903 = vmatpush1.msra.mxu0 0.0
        %904 = vmatprep.subr.mxu0 0.0
        %905 = vmatpush1.msra.mxu0 0.0
        %906 = vmatprep.mubr.f32.mxu0 0.0
        %907 = vmatmul.mubr.f32.gmra.mrb[0].mxu0 %v819
        %v908 = vpop.f32.mrb[0].mxu0
        %v909 = vadd.f32 %v841, %v908
        %v910 = vpop.f32.mrb[0].mxu0
        %911 = vdwg.mxu0
        %v912 = vmax.f32 %v909, 0.0
        %v913 = vrot.slane %v912, 7
        %v914 = vsel %vm245, %v913, 0.0
        %v915 = vrot.slane %v912, 1
        %v916 = vsel %vm246, %v915, 0.0
        %917 = vrot.lane.b32.xlu0 %v914, 40
        %v918 = vpop.permute.xlu0 %917
        %s919 = scalar_lea.vmem [#allocation5], 64
        %v920 = vld [vmem:[%s919] sm:$0x1]
        %v921 = vlaneseq
        %v922 = vshrl.u32 %v921, 7
        %v923 = vsub.s32 0, %v922
        %v924 = vrot.slane %v920, %v923
        %v925 = vmul.f32 %v918, %v924
        %926 = vrot.lane.b32.xlu0 %v914, 32
        %v927 = vpop.permute.xlu0 %926
        %v928 = vld [vmem:[%s919 + $0x1] sm:$0x1]
        %v929 = vlaneseq
        %v930 = vshrl.u32 %v929, 7
        %v931 = vsub.s32 0, %v930
        %v932 = vrot.slane %v928, %v931
        %v933 = vmul.f32 %v927, %v932
        %v934 = vadd.f32 %v925, %v933
        %935 = vrot.lane.b32.xlu0 %v914, 24
        %v936 = vpop.permute.xlu0 %935
        %v937 = vld [vmem:[%s919 + $0x2] sm:$0x1]
        %v938 = vlaneseq
        %v939 = vshrl.u32 %v938, 7
        %v940 = vsub.s32 0, %v939
        %v941 = vrot.slane %v937, %v940
        %v942 = vmul.f32 %v936, %v941
        %v943 = vadd.f32 %v934, %v942
        %944 = vrot.lane.b32.xlu0 %v914, 8
        %v945 = vpop.permute.xlu0 %944
        %v946 = vld [vmem:[%s919 + $0x3] sm:$0x1]
        %v947 = vlaneseq
        %v948 = vshrl.u32 %v947, 7
        %v949 = vsub.s32 0, %v948
        %v950 = vrot.slane %v946, %v949
        %v951 = vmul.f32 %v945, %v950
        %v952 = vadd.f32 %v943, %v951
        %v953 = vld [vmem:[%s919 + $0x4] sm:$0x1]
        %v954 = vlaneseq
        %v955 = vshrl.u32 %v954, 7
        %v956 = vsub.s32 0, %v955
        %v957 = vrot.slane %v953, %v956
        %v958 = vmul.f32 %v914, %v957
        %v959 = vadd.f32 %v952, %v958
        %960 = vrot.lane.b32.xlu0 %v914, 120
        %v961 = vpop.permute.xlu0 %960
        %v962 = vld [vmem:[%s919 + $0x5] sm:$0x1]
        %v963 = vlaneseq
        %v964 = vshrl.u32 %v963, 7
        %v965 = vsub.s32 0, %v964
        %v966 = vrot.slane %v962, %v965
        %v967 = vmul.f32 %v961, %v966
        %v968 = vadd.f32 %v959, %v967
        %969 = vrot.lane.b32.xlu0 %v914, 104
        %v970 = vpop.permute.xlu0 %969
        %v971 = vld [vmem:[%s919 + $0x6] sm:$0x1]
        %v972 = vlaneseq
        %v973 = vshrl.u32 %v972, 7
        %v974 = vsub.s32 0, %v973
        %v975 = vrot.slane %v971, %v974
        %v976 = vmul.f32 %v970, %v975
        %v977 = vadd.f32 %v968, %v976
        %978 = vrot.lane.b32.xlu0 %v914, 96
        %v979 = vpop.permute.xlu0 %978
        %v980 = vld [vmem:[%s919 + $0x7] sm:$0x1]
        %v981 = vlaneseq
        %v982 = vshrl.u32 %v981, 7
        %v983 = vsub.s32 0, %v982
        %v984 = vrot.slane %v980, %v983
        %v985 = vmul.f32 %v979, %v984
        %v986 = vadd.f32 %v977, %v985
        %987 = vrot.lane.b32.xlu0 %v914, 88
        %v988 = vpop.permute.xlu0 %987
        %v989 = vld [vmem:[%s919 + $0x8] sm:$0x1]
        %v990 = vlaneseq
        %v991 = vshrl.u32 %v990, 7
        %v992 = vsub.s32 0, %v991
        %v993 = vrot.slane %v989, %v992
        %v994 = vmul.f32 %v988, %v993
        %v995 = vadd.f32 %v986, %v994
        %996 = vrot.lane.b32.xlu0 %v912, 40
        %v997 = vpop.permute.xlu0 %996
        %v998 = vld [vmem:[%s919 + $0x9] sm:$0x1]
        %v999 = vlaneseq
        %v1000 = vshrl.u32 %v999, 7
        %v1001 = vsub.s32 0, %v1000
        %v1002 = vrot.slane %v998, %v1001
        %v1003 = vmul.f32 %v997, %v1002
        %v1004 = vadd.f32 %v995, %v1003
        %1005 = vrot.lane.b32.xlu0 %v912, 32
        %v1006 = vpop.permute.xlu0 %1005
        %v1007 = vld [vmem:[%s919 + $0xa] sm:$0x1]
        %v1008 = vlaneseq
        %v1009 = vshrl.u32 %v1008, 7
        %v1010 = vsub.s32 0, %v1009
        %v1011 = vrot.slane %v1007, %v1010
        %v1012 = vmul.f32 %v1006, %v1011
        %v1013 = vadd.f32 %v1004, %v1012
        %1014 = vrot.lane.b32.xlu0 %v912, 24
        %v1015 = vpop.permute.xlu0 %1014
        %v1016 = vld [vmem:[%s919 + $0xb] sm:$0x1]
        %v1017 = vlaneseq
        %v1018 = vshrl.u32 %v1017, 7
        %v1019 = vsub.s32 0, %v1018
        %v1020 = vrot.slane %v1016, %v1019
        %v1021 = vmul.f32 %v1015, %v1020
        %v1022 = vadd.f32 %v1013, %v1021
        %1023 = vrot.lane.b32.xlu0 %v912, 8
        %v1024 = vpop.permute.xlu0 %1023
        %v1025 = vld [vmem:[%s919 + $0xc] sm:$0x1]
        %v1026 = vlaneseq
        %v1027 = vshrl.u32 %v1026, 7
        %v1028 = vsub.s32 0, %v1027
        %v1029 = vrot.slane %v1025, %v1028
        %v1030 = vmul.f32 %v1024, %v1029
        %v1031 = vadd.f32 %v1022, %v1030
        %v1032 = vld [vmem:[%s919 + $0xd] sm:$0x1]
        %v1033 = vlaneseq
        %v1034 = vshrl.u32 %v1033, 7
        %v1035 = vsub.s32 0, %v1034
        %v1036 = vrot.slane %v1032, %v1035
        %v1037 = vmul.f32 %v912, %v1036
        %v1038 = vadd.f32 %v1031, %v1037
        %1039 = vrot.lane.b32.xlu0 %v912, 120
        %v1040 = vpop.permute.xlu0 %1039
        %v1041 = vld [vmem:[%s919 + $0xe] sm:$0x1]
        %v1042 = vlaneseq
        %v1043 = vshrl.u32 %v1042, 7
        %v1044 = vsub.s32 0, %v1043
        %v1045 = vrot.slane %v1041, %v1044
        %v1046 = vmul.f32 %v1040, %v1045
        %v1047 = vadd.f32 %v1038, %v1046
        %1048 = vrot.lane.b32.xlu0 %v912, 104
        %v1049 = vpop.permute.xlu0 %1048
        %v1050 = vld [vmem:[%s919 + $0xf] sm:$0x1]
        %v1051 = vlaneseq
        %v1052 = vshrl.u32 %v1051, 7
        %v1053 = vsub.s32 0, %v1052
        %v1054 = vrot.slane %v1050, %v1053
        %v1055 = vmul.f32 %v1049, %v1054
        %v1056 = vadd.f32 %v1047, %v1055
        %1057 = vrot.lane.b32.xlu0 %v912, 96
        %v1058 = vpop.permute.xlu0 %1057
        %v1059 = vld [vmem:[%s919 + $0x10] sm:$0x1]
        %v1060 = vlaneseq
        %v1061 = vshrl.u32 %v1060, 7
        %v1062 = vsub.s32 0, %v1061
        %v1063 = vrot.slane %v1059, %v1062
        %v1064 = vmul.f32 %v1058, %v1063
        %v1065 = vadd.f32 %v1056, %v1064
        %1066 = vrot.lane.b32.xlu0 %v912, 88
        %v1067 = vpop.permute.xlu0 %1066
        %v1068 = vld [vmem:[%s919 + $0x11] sm:$0x1]
        %v1069 = vlaneseq
        %v1070 = vshrl.u32 %v1069, 7
        %v1071 = vsub.s32 0, %v1070
        %v1072 = vrot.slane %v1068, %v1071
        %v1073 = vmul.f32 %v1067, %v1072
        %v1074 = vadd.f32 %v1065, %v1073
        %1075 = vrot.lane.b32.xlu0 %v916, 40
        %v1076 = vpop.permute.xlu0 %1075
        %v1077 = vld [vmem:[%s919 + $0x12] sm:$0x1]
        %v1078 = vlaneseq
        %v1079 = vshrl.u32 %v1078, 7
        %v1080 = vsub.s32 0, %v1079
        %v1081 = vrot.slane %v1077, %v1080
        %v1082 = vmul.f32 %v1076, %v1081
        %v1083 = vadd.f32 %v1074, %v1082
        %1084 = vrot.lane.b32.xlu0 %v916, 32
        %v1085 = vpop.permute.xlu0 %1084
        %v1086 = vld [vmem:[%s919 + $0x13] sm:$0x1]
        %v1087 = vlaneseq
        %v1088 = vshrl.u32 %v1087, 7
        %v1089 = vsub.s32 0, %v1088
        %v1090 = vrot.slane %v1086, %v1089
        %v1091 = vmul.f32 %v1085, %v1090
        %v1092 = vadd.f32 %v1083, %v1091
        %1093 = vrot.lane.b32.xlu0 %v916, 24
        %v1094 = vpop.permute.xlu0 %1093
        %v1095 = vld [vmem:[%s919 + $0x14] sm:$0x1]
        %v1096 = vlaneseq
        %v1097 = vshrl.u32 %v1096, 7
        %v1098 = vsub.s32 0, %v1097
        %v1099 = vrot.slane %v1095, %v1098
        %v1100 = vmul.f32 %v1094, %v1099
        %v1101 = vadd.f32 %v1092, %v1100
        %1102 = vrot.lane.b32.xlu0 %v916, 8
        %v1103 = vpop.permute.xlu0 %1102
        %v1104 = vld [vmem:[%s919 + $0x15] sm:$0x1]
        %v1105 = vlaneseq
        %v1106 = vshrl.u32 %v1105, 7
        %v1107 = vsub.s32 0, %v1106
        %v1108 = vrot.slane %v1104, %v1107
        %v1109 = vmul.f32 %v1103, %v1108
        %v1110 = vadd.f32 %v1101, %v1109
        %v1111 = vld [vmem:[%s919 + $0x16] sm:$0x1]
        %v1112 = vlaneseq
        %v1113 = vshrl.u32 %v1112, 7
        %v1114 = vsub.s32 0, %v1113
        %v1115 = vrot.slane %v1111, %v1114
        %v1116 = vmul.f32 %v916, %v1115
        %v1117 = vadd.f32 %v1110, %v1116
        %1118 = vrot.lane.b32.xlu0 %v916, 120
        %v1119 = vpop.permute.xlu0 %1118
        %v1120 = vld [vmem:[%s919 + $0x17] sm:$0x1]
        %v1121 = vlaneseq
        %v1122 = vshrl.u32 %v1121, 7
        %v1123 = vsub.s32 0, %v1122
        %v1124 = vrot.slane %v1120, %v1123
        %v1125 = vmul.f32 %v1119, %v1124
        %v1126 = vadd.f32 %v1117, %v1125
        %1127 = vrot.lane.b32.xlu0 %v916, 104
        %v1128 = vpop.permute.xlu0 %1127
        %v1129 = vld [vmem:[%s919 + $0x18] sm:$0x1]
        %v1130 = vlaneseq
        %v1131 = vshrl.u32 %v1130, 7
        %v1132 = vsub.s32 0, %v1131
        %v1133 = vrot.slane %v1129, %v1132
        %v1134 = vmul.f32 %v1128, %v1133
        %v1135 = vadd.f32 %v1126, %v1134
        %1136 = vrot.lane.b32.xlu0 %v916, 96
        %v1137 = vpop.permute.xlu0 %1136
        %v1138 = vld [vmem:[%s919 + $0x19] sm:$0x1]
        %v1139 = vlaneseq
        %v1140 = vshrl.u32 %v1139, 7
        %v1141 = vsub.s32 0, %v1140
        %v1142 = vrot.slane %v1138, %v1141
        %v1143 = vmul.f32 %v1137, %v1142
        %v1144 = vadd.f32 %v1135, %v1143
        %1145 = vrot.lane.b32.xlu0 %v916, 88
        %v1146 = vpop.permute.xlu0 %1145
        %v1147 = vld [vmem:[%s919 + $0x1a] sm:$0x1]
        %v1148 = vlaneseq
        %v1149 = vshrl.u32 %v1148, 7
        %v1150 = vsub.s32 0, %v1149
        %v1151 = vrot.slane %v1147, %v1150
        %v1152 = vmul.f32 %v1146, %v1151
        %v1153 = vadd.f32 %v1144, %v1152
        %s1154 = scalar_lea.vmem [#allocation7], 256
        %v1155 = vld [vmem:[%s1154] sm:$0xff]
        %v1156 = vld [vmem:[%s1154 + $0x8] sm:$0xff]
        %v1157 = vld [vmem:[%s1154 + $0x10] sm:$0xff]
        %v1158 = vld [vmem:[%s1154 + $0x18] sm:$0xff]
        %v1159 = vld [vmem:[%s1154 + $0x20] sm:$0xff]
        %v1160 = vld [vmem:[%s1154 + $0x28] sm:$0xff]
        %v1161 = vld [vmem:[%s1154 + $0x30] sm:$0xff]
        %v1162 = vld [vmem:[%s1154 + $0x38] sm:$0xff]
        %v1163 = vld [vmem:[%s1154 + $0x40] sm:$0xff]
        %v1164 = vld [vmem:[%s1154 + $0x48] sm:$0xff]
        %v1165 = vld [vmem:[%s1154 + $0x50] sm:$0xff]
        %v1166 = vld [vmem:[%s1154 + $0x58] sm:$0xff]
        %v1167 = vld [vmem:[%s1154 + $0x60] sm:$0xff]
        %v1168 = vld [vmem:[%s1154 + $0x68] sm:$0xff]
        %v1169 = vld [vmem:[%s1154 + $0x70] sm:$0xff]
        %v1170 = vld [vmem:[%s1154 + $0x78] sm:$0xff]
        %v1171 = vld [vmem:[%s3 + $0x2] sm:$0x1]
        %v1172 = vlaneseq
        %v1173 = vshrl.u32 %v1172, 7
        %v1174 = vsub.s32 0, %v1173
        %v1175 = vrot.slane %v1171, %v1174
        %1176 = vmatprep.subr.mxu0 0.0
        %1177 = vmatpush1.msra.mxu0 %v1155
        %1178 = vmatprep.subr.mxu0 0.0
        %1179 = vmatpush1.msra.mxu0 %v1156
        %1180 = vmatprep.subr.mxu0 0.0
        %1181 = vmatpush1.msra.mxu0 %v1157
        %1182 = vmatprep.subr.mxu0 0.0
        %1183 = vmatpush1.msra.mxu0 %v1158
        %1184 = vmatprep.subr.mxu0 0.0
        %1185 = vmatpush1.msra.mxu0 %v1159
        %1186 = vmatprep.subr.mxu0 0.0
        %1187 = vmatpush1.msra.mxu0 %v1160
        %1188 = vmatprep.subr.mxu0 0.0
        %1189 = vmatpush1.msra.mxu0 %v1161
        %1190 = vmatprep.subr.mxu0 0.0
        %1191 = vmatpush1.msra.mxu0 %v1162
        %1192 = vmatprep.subr.mxu0 0.0
        %1193 = vmatpush1.msra.mxu0 %v1163
        %1194 = vmatprep.subr.mxu0 0.0
        %1195 = vmatpush1.msra.mxu0 %v1164
        %1196 = vmatprep.subr.mxu0 0.0
        %1197 = vmatpush1.msra.mxu0 %v1165
        %1198 = vmatprep.subr.mxu0 0.0
        %1199 = vmatpush1.msra.mxu0 %v1166
        %1200 = vmatprep.subr.mxu0 0.0
        %1201 = vmatpush1.msra.mxu0 %v1167
        %1202 = vmatprep.subr.mxu0 0.0
        %1203 = vmatpush1.msra.mxu0 %v1168
        %1204 = vmatprep.subr.mxu0 0.0
        %1205 = vmatpush1.msra.mxu0 %v1169
        %1206 = vmatprep.subr.mxu0 0.0
        %1207 = vmatpush1.msra.mxu0 %v1170
        %1208 = vmatprep.subr.mxu0 0.0
        %1209 = vmatpush1.msra.mxu0 0.0
        %1210 = vmatprep.subr.mxu0 0.0
        %1211 = vmatpush1.msra.mxu0 0.0
        %1212 = vmatprep.subr.mxu0 0.0
        %1213 = vmatpush1.msra.mxu0 0.0
        %1214 = vmatprep.subr.mxu0 0.0
        %1215 = vmatpush1.msra.mxu0 0.0
        %1216 = vmatprep.subr.mxu0 0.0
        %1217 = vmatpush1.msra.mxu0 0.0
        %1218 = vmatprep.subr.mxu0 0.0
        %1219 = vmatpush1.msra.mxu0 0.0
        %1220 = vmatprep.subr.mxu0 0.0
        %1221 = vmatpush1.msra.mxu0 0.0
        %1222 = vmatprep.subr.mxu0 0.0
        %1223 = vmatpush1.msra.mxu0 0.0
        %1224 = vmatprep.subr.mxu0 0.0
        %1225 = vmatpush1.msra.mxu0 0.0
        %1226 = vmatprep.subr.mxu0 0.0
        %1227 = vmatpush1.msra.mxu0 0.0
        %1228 = vmatprep.subr.mxu0 0.0
        %1229 = vmatpush1.msra.mxu0 0.0
        %1230 = vmatprep.subr.mxu0 0.0
        %1231 = vmatpush1.msra.mxu0 0.0
        %1232 = vmatprep.subr.mxu0 0.0
        %1233 = vmatpush1.msra.mxu0 0.0
        %1234 = vmatprep.subr.mxu0 0.0
        %1235 = vmatpush1.msra.mxu0 0.0
        %1236 = vmatprep.subr.mxu0 0.0
        %1237 = vmatpush1.msra.mxu0 0.0
        %1238 = vmatprep.subr.mxu0 0.0
        %1239 = vmatpush1.msra.mxu0 0.0
        %1240 = vmatprep.mubr.f32.mxu0 0.0
        %1241 = vmatmul.mubr.f32.gmra.mrb[0].mxu0 %v1153
        %v1242 = vpop.f32.mrb[0].mxu0
        %v1243 = vadd.f32 %v1175, %v1242
        %v1244 = vpop.f32.mrb[0].mxu0
        %1245 = vdwg.mxu0
        %v1246 = vmax.f32 %v1243, 0.0
        %v1247 = vadd.f32 %v1246, %v242
        %v1248 = vmax.f32 %v1247, 0.0
        %1249 = vst [vmem:[%s241] sm:$0xff] %v1248
        %s1250 = sand.u32 %s119, 1
        %s1251 = scalar_lea.sflag [#allocation4], %s1250
        %s1252 = sand.u32 %s119, 1
        %s1253 = smul.addr %s1252, 8
        %s1254 = scalar_lea.vmem [#allocation8], %s1253
        // Predicated region
        $region49: #{tpu_custom_call.1} parent=35 // pred_check
          %p1255 = pneg %p129
        $region50: #{tpu_custom_call.1} parent=35 // pred_check_branch
          %1257 = sbr.rel (%p1255) target = $region52
        $region51: #{tpu_custom_call.1} parent=35 // pred_region
          %s1259 = ssub.s32 128, 128
          %1260 = vsyncadd %s1251, %s1259
          %s1261 = smul.addr %s22, 128
          %s1262 = scalar_lea.hbm %s4, %s1261
          %s1264 = sshll.u32 %s1254, 4
          %s1265 = int_to_ptr.vmem [resolvable:$true] %s1264
          %1267 = dma.vmem_to_hbm [thread:$0]  %s1265, 128, %s1262, %s1251
        $region52: #{tpu_custom_call.1} parent=35 // pred_fallthru
          _
      $region36: #{tpu_custom_call.1} parent=5 // pred_fallthru
        _
      %p1268 = scmp.le.s32.totalorder 2, %s17
      // Predicated region
      $region53: #{tpu_custom_call.1} parent=5 // pred_check
        %p1269 = pneg %p1268
      $region54: #{tpu_custom_call.1} parent=5 // pred_check_branch
        %1271 = sbr.rel (%p1269) target = $region56
      $region55: #{tpu_custom_call.1} parent=5 // pred_region
        %s1272 = ssub.s32 %s17, 2
        // Predicated region
        $region57: #{tpu_custom_call.1} parent=55 // pred_check
          %p1273 = pneg %p135
        $region58: #{tpu_custom_call.1} parent=55 // pred_check_branch
          %1275 = sbr.rel (%p1273) target = $region60
        $region59: #{tpu_custom_call.1} parent=55 // pred_region
          %s1276 = sand.u32 %s120, 1
          %s1277 = scalar_lea.sflag [#allocation4], %s1276
          %s1278 = sand.u32 %s120, 1
          %s1279 = smul.addr %s1278, 8
          %s1280 = scalar_lea.vmem [#allocation8], %s1279
          %1281 = dma.done %s1277, 128
        $region60: #{tpu_custom_call.1} parent=55 // pred_fallthru
          _
      $region56: #{tpu_custom_call.1} parent=5 // pred_fallthru
        _
    $region6: #{tpu_custom_call.1} parent=1 // loop_footer
      %s21 = sadd.s32 1, %s17
    $region7: #{tpu_custom_call.1} parent=1 // loop_footer_branch
      %16 = sbr.rel target = $region3
    $region8: #{tpu_custom_call.1} parent=1 // loop_exit
      _
    %1282 = vsyncpa [#allocation3], 1
    %s1283 = scalar_lea.sflag [#allocation3], 1
    %1284 = vsyncpa %s1283, 1
    %1285 = vsyncpa [#allocation6], 1
    %1286 = vsyncpa [#allocation4], 1
    %s1287 = scalar_lea.sflag [#allocation4], 1
    %1288 = vsyncpa %s1287, 1

</llo_original>
